<compile_context>
chip_gen: v6e
topology: v6e:2x2x1
jax: 0.10.0
libtpu: 0.0.40
codegen_flags: <defaults>
</compile_context>

<pallas_src>
import jax
import jax.numpy as jnp
from jax import lax
from jax.experimental import pallas as pl
from jax.experimental.pallas import tpu as pltpu

# ---- model config (parse_config("8_6_16")) ----
NUM_FILTERS = 8
CONV_K = 6
POOL_K = 16
IN_H = IN_W = 75
NUM_PIX = IN_H * IN_W                     # 5625
FEAT_HW = IN_H // POOL_K                  # 4   (AvgPool2d floor drops rows/cols 64..74)
POOLED_REGION = FEAT_HW * POOL_K          # 64
NUM_CLASSES = 10
PAD_LO = (CONV_K - 1) // 2                # 2   (PyTorch 'same' with even kernel pads (2,3))
PAD_HI = (CONV_K - 1) - PAD_LO            # 3
PAD_H = IN_H + CONV_K - 1                 # 80
PAD_W = IN_W + CONV_K - 1                 # 80


def _round_up(n, m):
    return ((n + m - 1) // m) * m


def _rfn_kernel(x_ref, w_ref, b_ref, o_ref):
    """One block of NB images: a single MXU GEMM with f32 accumulation.

    x_ref : (NB, 5625)  raw image pixels (f32, streamed)
    w_ref : (5625, 10)  effective weight (conv + pad + pool + classifier folded)
    b_ref : (1, 10)     effective bias   (lin_b + pooled conv-bias through classifier)
    o_ref : (NB, 10)    logits
    """
    o_ref[...] = b_ref[...] + jnp.dot(x_ref[...], w_ref[...],
                                      preferred_element_type=jnp.float32)


def _effective_params(conv_w, conv_b, lin_w, lin_b):
    """Contract conv ('same' pad) + 16x16 avg-pool + classifier into (5625,10) and (1,10).

    logits[n, c] = const[0, c] + sum_{r,s} weff[r*75 + s, c] * x[n, 0, r, s]
    """
    w = conv_w[:, 0].astype(jnp.float32)                                     # (F, 6, 6)
    lw = lin_w.astype(jnp.float32).reshape(NUM_CLASSES, NUM_FILTERS,
                                           FEAT_HW, FEAT_HW)                 # [c, f, i, j]
    # Window indicator over padded coords p in [0, 80):
    #   R[i, dy, p] = 1  iff conv tap dy of a row inside pool window i reads padded row p,
    #   i.e. 16*i + dy <= p < 16*i + dy + 16.   (Same matrix serves columns.)
    p = jnp.arange(PAD_H)
    start = (POOL_K * jnp.arange(FEAT_HW)[:, None]
             + jnp.arange(CONV_K)[None, :])                                  # (4, 6)
    R = ((p[None, None, :] >= start[:, :, None]) &
         (p[None, None, :] < start[:, :, None] + POOL_K)
         ).astype(jnp.float32)                                               # (4, 6, 80)

    t = jnp.einsum('cfij,fyx->cijyx', lw, w)                                 # (10,4,4,6,6)
    t = jnp.einsum('cijyx,iyp->cjxp', t, R)                                  # (10,4,6,80)
    w_img = jnp.einsum('cjxp,jxq->cpq', t, R) / float(POOL_K * POOL_K)       # (10,80,80)
    # Padded pixel (p, q) maps to original pixel (p-2, q-2); coefficients that fall on the
    # zero padding are dropped by the slice.
    w_pix = w_img[:, PAD_LO:PAD_LO + IN_H, PAD_LO:PAD_LO + IN_W]             # (10,75,75)
    weff = w_pix.transpose(1, 2, 0).reshape(NUM_PIX, NUM_CLASSES)            # (5625, 10)
    # Conv bias averages to itself through the pool; push it through the classifier.
    const = (lin_b.astype(jnp.float32)
             + jnp.einsum('f,cfij->c', conv_b.astype(jnp.float32), lw)
             ).reshape(1, NUM_CLASSES)                                       # (1, 10)
    return weff, const


def rfn_forward(x, conv_w, conv_b, lin_w, lin_b, *, batch_block=256):
    """x: (N, 1, 75, 75) f32; returns (N, 10) f32 — identical to the PyTorch forward."""
    N = x.shape[0]
    xf = x.reshape(N, NUM_PIX).astype(jnp.float32)    # free reshape; no padded HBM copy

    # Batch blocking: NB images per grid step (multiple of 8 for the sublane dim).
    nb = min(batch_block, _round_up(N, 8))
    if nb == _round_up(N, 8) and N >= 64:
        # A single oversized block would leave one v7x TensorCore idle; prefer >=2 steps.
        nb = _round_up((N + 1) // 2, 8)
    n_pad = _round_up(N, nb)
    if n_pad != N:
        xf = jnp.pad(xf, ((0, n_pad - N), (0, 0)))    # only copies when N % nb != 0

    weff, const = _effective_params(conv_w, conv_b, lin_w, lin_b)

    flops = 2 * n_pad * NUM_PIX * NUM_CLASSES
    bytes_accessed = 4 * (n_pad * NUM_PIX + NUM_PIX * NUM_CLASSES
                          + NUM_CLASSES + n_pad * NUM_CLASSES)

    out = pl.pallas_call(
        _rfn_kernel,
        out_shape=jax.ShapeDtypeStruct((n_pad, NUM_CLASSES), jnp.float32),
        grid=(n_pad // nb,),
        in_specs=[
            pl.BlockSpec((nb, NUM_PIX), lambda b: (b, 0)),            # image block (streamed)
            pl.BlockSpec((NUM_PIX, NUM_CLASSES), lambda b: (0, 0)),   # weff (resident)
            pl.BlockSpec((1, NUM_CLASSES), lambda b: (0, 0)),         # const (resident)
        ],
        out_specs=pl.BlockSpec((nb, NUM_CLASSES), lambda b: (b, 0)),
        compiler_params=pltpu.CompilerParams(
            dimension_semantics=("parallel",),
            vmem_limit_bytes=32 * 1024 * 1024),
        cost_estimate=pl.CostEstimate(flops=flops, transcendentals=0,
                                      bytes_accessed=bytes_accessed),
    )(xf, weff, const)
    return out[:N]


def rfn_reference(x, conv_w, conv_b, lin_w, lin_b):
    """Pure-JAX reference matching the PyTorch module semantics (high precision)."""
    conv = lax.conv_general_dilated(
        x, conv_w, window_strides=(1, 1),
        padding=((PAD_LO, PAD_HI), (PAD_LO, PAD_HI)),
        dimension_numbers=("NCHW", "OIHW", "NCHW"),
        precision=lax.Precision.HIGHEST) + conv_b[None, :, None, None]
    c = conv[:, :, :POOLED_REGION, :POOLED_REGION]
    N, F = c.shape[0], c.shape[1]
    p = c.reshape(N, F, FEAT_HW, POOL_K, FEAT_HW, POOL_K).mean(axis=(3, 5))
    feat = p.reshape(N, F * FEAT_HW * FEAT_HW)
    return jnp.dot(feat, lin_w.T, precision=lax.Precision.HIGHEST) + lin_b


if __name__ == "__main__":
    key = jax.random.PRNGKey(0)
    k1, k2, k3, k4, k5 = jax.random.split(key, 5)

    # deterministic synthetic parameters (shapes from RFNMNIST.__init__ for "8_6_16")
    conv_w = jax.random.normal(k2, (NUM_FILTERS, 1, CONV_K, CONV_K), jnp.float32)
    conv_b = jax.random.uniform(k3, (NUM_FILTERS,), jnp.float32, -0.1, 0.1)
    fan_in = NUM_FILTERS * FEAT_HW * FEAT_HW          # 128
    bound = 1.0 / (fan_in ** 0.5)
    lin_w = jax.random.uniform(k4, (NUM_CLASSES, fan_in), jnp.float32, -bound, bound)
    lin_b = jax.random.uniform(k5, (NUM_CLASSES,), jnp.float32, -bound, bound)

    # Test 1: tiny batch (N=2 -> NB=8, single grid step).
    x = jax.random.uniform(k1, (2, 1, IN_H, IN_W), jnp.float32)
    out = jax.block_until_ready(rfn_forward(x, conv_w, conv_b, lin_w, lin_b))
    assert out.shape == (2, NUM_CLASSES)
    ref = rfn_reference(x, conv_w, conv_b, lin_w, lin_b)
    assert jnp.allclose(out, ref, rtol=2e-2, atol=2e-2), (out, ref)

    # Test 2: multi-step grid with batch padding (N=20, NB=8 -> 3 grid steps).
    x2 = jax.random.uniform(jax.random.fold_in(key, 7), (20, 1, IN_H, IN_W), jnp.float32)
    out2 = jax.block_until_ready(
        rfn_forward(x2, conv_w, conv_b, lin_w, lin_b, batch_block=8))
    assert out2.shape == (20, NUM_CLASSES)
    ref2 = rfn_reference(x2, conv_w, conv_b, lin_w, lin_b)
    assert jnp.allclose(out2, ref2, rtol=2e-2, atol=2e-2), (out2, ref2)

    print("KERNEL_OK")
</pallas_src>

<mosaic_0001>
module attributes {stable_mosaic.version = 11 : i64} {
  func.func @_rfn_kernel(%arg0: i32, %arg1: memref<8x5625xf32, #tpu.memory_space<vmem>>, %arg2: memref<5625x10xf32, #tpu.memory_space<vmem>>, %arg3: memref<1x10xf32, #tpu.memory_space<vmem>>, %arg4: memref<8x10xf32, #tpu.memory_space<vmem>>) attributes {dimension_semantics = [#tpu.dimension_semantics<parallel>], iteration_bounds = array<i64: 1>, scalar_prefetch = 0 : i64, scratch_operands = 0 : i64, tpu.core_type = #tpu.core_type<tc>, window_params = [{transform_indices = @transform_0, window_bounds = array<i64: 8, 5625>}, {pipeline_mode = #tpu.pipeline_mode<synchronous>, transform_indices = @transform_1, window_bounds = array<i64: 5625, 10>}, {pipeline_mode = #tpu.pipeline_mode<synchronous>, transform_indices = @transform_2, window_bounds = array<i64: 1, 10>}, {transform_indices = @transform_3, window_bounds = array<i64: 8, 10>}]} {
    %c0 = arith.constant 0 : index
    %c0_0 = arith.constant 0 : index
    %0 = vector.load %arg3[%c0, %c0_0] : memref<1x10xf32, #tpu.memory_space<vmem>>, vector<1x10xf32>
    %c0_1 = arith.constant 0 : index
    %c0_2 = arith.constant 0 : index
    %1 = vector.load %arg1[%c0_1, %c0_2] : memref<8x5625xf32, #tpu.memory_space<vmem>>, vector<8x5625xf32>
    %c0_3 = arith.constant 0 : index
    %c0_4 = arith.constant 0 : index
    %2 = vector.load %arg2[%c0_3, %c0_4] : memref<5625x10xf32, #tpu.memory_space<vmem>>, vector<5625x10xf32>
    %cst = arith.constant dense<0.000000e+00> : vector<8x10xf32>
    %3 = tpu.matmul %1, %2, %cst {dimension_numbers = #tpu.dot_dimension_numbers<[1], [0], [0], [1], [0, 0, 1, 1], [], []>} : vector<8x5625xf32>, vector<5625x10xf32>, vector<8x10xf32> -> vector<8x10xf32>
    %4 = vector.broadcast %0 : vector<1x10xf32> to vector<8x10xf32>
    %5 = arith.addf %4, %3 : vector<8x10xf32>
    %c0_5 = arith.constant 0 : index
    %c0_6 = arith.constant 0 : index
    %6 = vector.load %arg4[%c0_5, %c0_6] : memref<8x10xf32, #tpu.memory_space<vmem>>, vector<8x10xf32>
    tpu.vector_store %arg4[%c0_5, %c0_6], %5 {strides = array<i32>} : memref<8x10xf32, #tpu.memory_space<vmem>>, vector<8x10xf32>,
    return
  }
  func.func @transform_0(%arg0: i32) -> (i32, i32) {
    %c0_i32 = arith.constant 0 : i32
    %c0_i32_0 = arith.constant 0 : i32
    return %arg0, %c0_i32 : i32, i32
  }
  func.func @transform_1(%arg0: i32) -> (i32, i32) {
    %c0_i32 = arith.constant 0 : i32
    %c0_i32_0 = arith.constant 0 : i32
    %c0_i32_1 = arith.constant 0 : i32
    return %c0_i32, %c0_i32_0 : i32, i32
  }
  func.func @transform_2(%arg0: i32) -> (i32, i32) {
    %c0_i32 = arith.constant 0 : i32
    %c0_i32_0 = arith.constant 0 : i32
    %c0_i32_1 = arith.constant 0 : i32
    return %c0_i32, %c0_i32_0 : i32, i32
  }
  func.func @transform_3(%arg0: i32) -> (i32, i32) {
    %c0_i32 = arith.constant 0 : i32
    %c0_i32_0 = arith.constant 0 : i32
    return %arg0, %c0_i32 : i32, i32
  }
}

</mosaic_0001>

<llo_original>
// kernel: tpu_custom_call.1
$region0: #{tpu_custom_call.1}
  #allocation0 [shape = 'u32[]', space=smem, size = 0x4, offset = 0x4, fixed_abs, tag = 'smem constant byte address 0x4 - core index']
  #allocation1 [shape = 'u32[144,128]{1,0:T(1,128)}', space=vmem, size = 0x12000, scoped, tag = 'internal scratch']
  %s0 = inlined_call_operand.vmem [shape: f32[8,5625], index: 0, kind: input, shape index: {}]
  %s1 = inlined_call_operand.vmem [shape: f32[5625,10], index: 1, kind: input, shape index: {}]
  %s2 = inlined_call_operand.vmem [shape: f32[1,10], index: 2, kind: input, shape index: {}]
  %s3 = inlined_call_operand.hbm [shape: f32[8,10], index: 3, kind: output, shape index: {}]
  %s4 = sld [smem:[#allocation0]]
  $region22: #{tpu_custom_call.1} parent=0
    _
  %s6 = ssub.s32 1, %s4
  %s7 = scalar_select 0, %s6, %s4
  $region1: #{tpu_custom_call.1} parent=0
    #allocation2 [shape = 'u8[4096]{0}', space=vmem, size = 0x1000, scoped, tag = 'output window, operand 0, single buffered']
    #allocation3 [shape = 's32[1]{0}', space=sflag, size = 0x4, scoped, tag = 'scoped memory for tpu_custom_call.1']
    %8 = vsyncpa [#allocation3], 0
    // Predicated region
    $region2: #{tpu_custom_call.1} parent=1 // pred_check
      _
    $region3: #{tpu_custom_call.1} parent=1 // pred_check_branch
      %10 = sbr.rel (0) target = $region5
    $region4: #{tpu_custom_call.1} parent=1 // pred_region
      _
    $region5: #{tpu_custom_call.1} parent=1 // pred_fallthru
      _
    // Predicated region
    $region6: #{tpu_custom_call.1} parent=1 // pred_check
      _
    $region7: #{tpu_custom_call.1} parent=1 // pred_check_branch
      %12 = sbr.rel (0) target = $region9
    $region8: #{tpu_custom_call.1} parent=1 // pred_region
      _
    $region9: #{tpu_custom_call.1} parent=1 // pred_fallthru
      _
    // Predicated region
    $region10: #{tpu_custom_call.1} parent=1 // pred_check
      _
    $region11: #{tpu_custom_call.1} parent=1 // pred_check_branch
      %14 = sbr.rel (0) target = $region13
    $region12: #{tpu_custom_call.1} parent=1 // pred_region
      _
    $region13: #{tpu_custom_call.1} parent=1 // pred_fallthru
      _
    %v15 = vld [vmem:[%s2] sm:$0x1]
    %v16 = vld [vmem:[%s0] sm:$0xff]
    %v17 = vld [vmem:[%s0 + $0x8] sm:$0xff]
    %v18 = vld [vmem:[%s0 + $0x10] sm:$0xff]
    %v19 = vld [vmem:[%s0 + $0x18] sm:$0xff]
    %v20 = vld [vmem:[%s0 + $0x20] sm:$0xff]
    %v21 = vld [vmem:[%s0 + $0x28] sm:$0xff]
    %v22 = vld [vmem:[%s0 + $0x30] sm:$0xff]
    %v23 = vld [vmem:[%s0 + $0x38] sm:$0xff]
    %v24 = vld [vmem:[%s0 + $0x40] sm:$0xff]
    %v25 = vld [vmem:[%s0 + $0x48] sm:$0xff]
    %v26 = vld [vmem:[%s0 + $0x50] sm:$0xff]
    %v27 = vld [vmem:[%s0 + $0x58] sm:$0xff]
    %v28 = vld [vmem:[%s0 + $0x60] sm:$0xff]
    %v29 = vld [vmem:[%s0 + $0x68] sm:$0xff]
    %v30 = vld [vmem:[%s0 + $0x70] sm:$0xff]
    %v31 = vld [vmem:[%s0 + $0x78] sm:$0xff]
    %v32 = vld [vmem:[%s0 + $0x80] sm:$0xff]
    %v33 = vld [vmem:[%s0 + $0x88] sm:$0xff]
    %v34 = vld [vmem:[%s0 + $0x90] sm:$0xff]
    %v35 = vld [vmem:[%s0 + $0x98] sm:$0xff]
    %v36 = vld [vmem:[%s0 + $0xa0] sm:$0xff]
    %v37 = vld [vmem:[%s0 + $0xa8] sm:$0xff]
    %v38 = vld [vmem:[%s0 + $0xb0] sm:$0xff]
    %v39 = vld [vmem:[%s0 + $0xb8] sm:$0xff]
    %v40 = vld [vmem:[%s0 + $0xc0] sm:$0xff]
    %v41 = vld [vmem:[%s0 + $0xc8] sm:$0xff]
    %v42 = vld [vmem:[%s0 + $0xd0] sm:$0xff]
    %v43 = vld [vmem:[%s0 + $0xd8] sm:$0xff]
    %v44 = vld [vmem:[%s0 + $0xe0] sm:$0xff]
    %v45 = vld [vmem:[%s0 + $0xe8] sm:$0xff]
    %v46 = vld [vmem:[%s0 + $0xf0] sm:$0xff]
    %v47 = vld [vmem:[%s0 + $0xf8] sm:$0xff]
    %v48 = vld [vmem:[%s0 + $0x100] sm:$0xff]
    %v49 = vld [vmem:[%s0 + $0x108] sm:$0xff]
    %v50 = vld [vmem:[%s0 + $0x110] sm:$0xff]
    %v51 = vld [vmem:[%s0 + $0x118] sm:$0xff]
    %v52 = vld [vmem:[%s0 + $0x120] sm:$0xff]
    %v53 = vld [vmem:[%s0 + $0x128] sm:$0xff]
    %v54 = vld [vmem:[%s0 + $0x130] sm:$0xff]
    %v55 = vld [vmem:[%s0 + $0x138] sm:$0xff]
    %v56 = vld [vmem:[%s0 + $0x140] sm:$0xff]
    %v57 = vld [vmem:[%s0 + $0x148] sm:$0xff]
    %v58 = vld [vmem:[%s0 + $0x150] sm:$0xff]
    %v59 = vld [vmem:[%s0 + $0x158] sm:$0xff]
    %v60 = vld [vmem:[%s1] sm:$0xff]
    %v61 = vld [vmem:[%s1 + $0x8] sm:$0xff]
    %v62 = vld [vmem:[%s1 + $0x10] sm:$0xff]
    %v63 = vld [vmem:[%s1 + $0x18] sm:$0xff]
    %v64 = vld [vmem:[%s1 + $0x20] sm:$0xff]
    %v65 = vld [vmem:[%s1 + $0x28] sm:$0xff]
    %v66 = vld [vmem:[%s1 + $0x30] sm:$0xff]
    %v67 = vld [vmem:[%s1 + $0x38] sm:$0xff]
    %v68 = vld [vmem:[%s1 + $0x40] sm:$0xff]
    %v69 = vld [vmem:[%s1 + $0x48] sm:$0xff]
    %v70 = vld [vmem:[%s1 + $0x50] sm:$0xff]
    %v71 = vld [vmem:[%s1 + $0x58] sm:$0xff]
    %v72 = vld [vmem:[%s1 + $0x60] sm:$0xff]
    %v73 = vld [vmem:[%s1 + $0x68] sm:$0xff]
    %v74 = vld [vmem:[%s1 + $0x70] sm:$0xff]
    %v75 = vld [vmem:[%s1 + $0x78] sm:$0xff]
    %v76 = vld [vmem:[%s1 + $0x80] sm:$0xff]
    %v77 = vld [vmem:[%s1 + $0x88] sm:$0xff]
    %v78 = vld [vmem:[%s1 + $0x90] sm:$0xff]
    %v79 = vld [vmem:[%s1 + $0x98] sm:$0xff]
    %v80 = vld [vmem:[%s1 + $0xa0] sm:$0xff]
    %v81 = vld [vmem:[%s1 + $0xa8] sm:$0xff]
    %v82 = vld [vmem:[%s1 + $0xb0] sm:$0xff]
    %v83 = vld [vmem:[%s1 + $0xb8] sm:$0xff]
    %v84 = vld [vmem:[%s1 + $0xc0] sm:$0xff]
    %v85 = vld [vmem:[%s1 + $0xc8] sm:$0xff]
    %v86 = vld [vmem:[%s1 + $0xd0] sm:$0xff]
    %v87 = vld [vmem:[%s1 + $0xd8] sm:$0xff]
    %v88 = vld [vmem:[%s1 + $0xe0] sm:$0xff]
    %v89 = vld [vmem:[%s1 + $0xe8] sm:$0xff]
    %v90 = vld [vmem:[%s1 + $0xf0] sm:$0xff]
    %v91 = vld [vmem:[%s1 + $0xf8] sm:$0xff]
    %v92 = vld [vmem:[%s1 + $0x100] sm:$0xff]
    %v93 = vld [vmem:[%s1 + $0x108] sm:$0xff]
    %v94 = vld [vmem:[%s1 + $0x110] sm:$0xff]
    %v95 = vld [vmem:[%s1 + $0x118] sm:$0xff]
    %v96 = vld [vmem:[%s1 + $0x120] sm:$0xff]
    %v97 = vld [vmem:[%s1 + $0x128] sm:$0xff]
    %v98 = vld [vmem:[%s1 + $0x130] sm:$0xff]
    %v99 = vld [vmem:[%s1 + $0x138] sm:$0xff]
    %v100 = vld [vmem:[%s1 + $0x140] sm:$0xff]
    %v101 = vld [vmem:[%s1 + $0x148] sm:$0xff]
    %v102 = vld [vmem:[%s1 + $0x150] sm:$0xff]
    %v103 = vld [vmem:[%s1 + $0x158] sm:$0xff]
    %v104 = vld [vmem:[%s1 + $0x160] sm:$0xff]
    %v105 = vld [vmem:[%s1 + $0x168] sm:$0xff]
    %v106 = vld [vmem:[%s1 + $0x170] sm:$0xff]
    %v107 = vld [vmem:[%s1 + $0x178] sm:$0xff]
    %v108 = vld [vmem:[%s1 + $0x180] sm:$0xff]
    %v109 = vld [vmem:[%s1 + $0x188] sm:$0xff]
    %v110 = vld [vmem:[%s1 + $0x190] sm:$0xff]
    %v111 = vld [vmem:[%s1 + $0x198] sm:$0xff]
    %v112 = vld [vmem:[%s1 + $0x1a0] sm:$0xff]
    %v113 = vld [vmem:[%s1 + $0x1a8] sm:$0xff]
    %v114 = vld [vmem:[%s1 + $0x1b0] sm:$0xff]
    %v115 = vld [vmem:[%s1 + $0x1b8] sm:$0xff]
    %v116 = vld [vmem:[%s1 + $0x1c0] sm:$0xff]
    %v117 = vld [vmem:[%s1 + $0x1c8] sm:$0xff]
    %v118 = vld [vmem:[%s1 + $0x1d0] sm:$0xff]
    %v119 = vld [vmem:[%s1 + $0x1d8] sm:$0xff]
    %v120 = vld [vmem:[%s1 + $0x1e0] sm:$0xff]
    %v121 = vld [vmem:[%s1 + $0x1e8] sm:$0xff]
    %v122 = vld [vmem:[%s1 + $0x1f0] sm:$0xff]
    %v123 = vld [vmem:[%s1 + $0x1f8] sm:$0xff]
    %v124 = vld [vmem:[%s1 + $0x200] sm:$0xff]
    %v125 = vld [vmem:[%s1 + $0x208] sm:$0xff]
    %v126 = vld [vmem:[%s1 + $0x210] sm:$0xff]
    %v127 = vld [vmem:[%s1 + $0x218] sm:$0xff]
    %v128 = vld [vmem:[%s1 + $0x220] sm:$0xff]
    %v129 = vld [vmem:[%s1 + $0x228] sm:$0xff]
    %v130 = vld [vmem:[%s1 + $0x230] sm:$0xff]
    %v131 = vld [vmem:[%s1 + $0x238] sm:$0xff]
    %v132 = vld [vmem:[%s1 + $0x240] sm:$0xff]
    %v133 = vld [vmem:[%s1 + $0x248] sm:$0xff]
    %v134 = vld [vmem:[%s1 + $0x250] sm:$0xff]
    %v135 = vld [vmem:[%s1 + $0x258] sm:$0xff]
    %v136 = vld [vmem:[%s1 + $0x260] sm:$0xff]
    %v137 = vld [vmem:[%s1 + $0x268] sm:$0xff]
    %v138 = vld [vmem:[%s1 + $0x270] sm:$0xff]
    %v139 = vld [vmem:[%s1 + $0x278] sm:$0xff]
    %v140 = vld [vmem:[%s1 + $0x280] sm:$0xff]
    %v141 = vld [vmem:[%s1 + $0x288] sm:$0xff]
    %v142 = vld [vmem:[%s1 + $0x290] sm:$0xff]
    %v143 = vld [vmem:[%s1 + $0x298] sm:$0xff]
    %v144 = vld [vmem:[%s1 + $0x2a0] sm:$0xff]
    %v145 = vld [vmem:[%s1 + $0x2a8] sm:$0xff]
    %v146 = vld [vmem:[%s1 + $0x2b0] sm:$0xff]
    %v147 = vld [vmem:[%s1 + $0x2b8] sm:$0xff]
    %v148 = vld [vmem:[%s1 + $0x2c0] sm:$0xff]
    %v149 = vld [vmem:[%s1 + $0x2c8] sm:$0xff]
    %v150 = vld [vmem:[%s1 + $0x2d0] sm:$0xff]
    %v151 = vld [vmem:[%s1 + $0x2d8] sm:$0xff]
    %v152 = vld [vmem:[%s1 + $0x2e0] sm:$0xff]
    %v153 = vld [vmem:[%s1 + $0x2e8] sm:$0xff]
    %v154 = vld [vmem:[%s1 + $0x2f0] sm:$0xff]
    %v155 = vld [vmem:[%s1 + $0x2f8] sm:$0xff]
    %v156 = vld [vmem:[%s1 + $0x300] sm:$0xff]
    %v157 = vld [vmem:[%s1 + $0x308] sm:$0xff]
    %v158 = vld [vmem:[%s1 + $0x310] sm:$0xff]
    %v159 = vld [vmem:[%s1 + $0x318] sm:$0xff]
    %v160 = vld [vmem:[%s1 + $0x320] sm:$0xff]
    %v161 = vld [vmem:[%s1 + $0x328] sm:$0xff]
    %v162 = vld [vmem:[%s1 + $0x330] sm:$0xff]
    %v163 = vld [vmem:[%s1 + $0x338] sm:$0xff]
    %v164 = vld [vmem:[%s1 + $0x340] sm:$0xff]
    %v165 = vld [vmem:[%s1 + $0x348] sm:$0xff]
    %v166 = vld [vmem:[%s1 + $0x350] sm:$0xff]
    %v167 = vld [vmem:[%s1 + $0x358] sm:$0xff]
    %v168 = vld [vmem:[%s1 + $0x360] sm:$0xff]
    %v169 = vld [vmem:[%s1 + $0x368] sm:$0xff]
    %v170 = vld [vmem:[%s1 + $0x370] sm:$0xff]
    %v171 = vld [vmem:[%s1 + $0x378] sm:$0xff]
    %v172 = vld [vmem:[%s1 + $0x380] sm:$0xff]
    %v173 = vld [vmem:[%s1 + $0x388] sm:$0xff]
    %v174 = vld [vmem:[%s1 + $0x390] sm:$0xff]
    %v175 = vld [vmem:[%s1 + $0x398] sm:$0xff]
    %v176 = vld [vmem:[%s1 + $0x3a0] sm:$0xff]
    %v177 = vld [vmem:[%s1 + $0x3a8] sm:$0xff]
    %v178 = vld [vmem:[%s1 + $0x3b0] sm:$0xff]
    %v179 = vld [vmem:[%s1 + $0x3b8] sm:$0xff]
    %v180 = vld [vmem:[%s1 + $0x3c0] sm:$0xff]
    %v181 = vld [vmem:[%s1 + $0x3c8] sm:$0xff]
    %v182 = vld [vmem:[%s1 + $0x3d0] sm:$0xff]
    %v183 = vld [vmem:[%s1 + $0x3d8] sm:$0xff]
    %v184 = vld [vmem:[%s1 + $0x3e0] sm:$0xff]
    %v185 = vld [vmem:[%s1 + $0x3e8] sm:$0xff]
    %v186 = vld [vmem:[%s1 + $0x3f0] sm:$0xff]
    %v187 = vld [vmem:[%s1 + $0x3f8] sm:$0xff]
    %v188 = vld [vmem:[%s1 + $0x400] sm:$0xff]
    %v189 = vld [vmem:[%s1 + $0x408] sm:$0xff]
    %v190 = vld [vmem:[%s1 + $0x410] sm:$0xff]
    %v191 = vld [vmem:[%s1 + $0x418] sm:$0xff]
    %v192 = vld [vmem:[%s1 + $0x420] sm:$0xff]
    %v193 = vld [vmem:[%s1 + $0x428] sm:$0xff]
    %v194 = vld [vmem:[%s1 + $0x430] sm:$0xff]
    %v195 = vld [vmem:[%s1 + $0x438] sm:$0xff]
    %v196 = vld [vmem:[%s1 + $0x440] sm:$0xff]
    %v197 = vld [vmem:[%s1 + $0x448] sm:$0xff]
    %v198 = vld [vmem:[%s1 + $0x450] sm:$0xff]
    %v199 = vld [vmem:[%s1 + $0x458] sm:$0xff]
    %v200 = vld [vmem:[%s1 + $0x460] sm:$0xff]
    %v201 = vld [vmem:[%s1 + $0x468] sm:$0xff]
    %v202 = vld [vmem:[%s1 + $0x470] sm:$0xff]
    %v203 = vld [vmem:[%s1 + $0x478] sm:$0xff]
    %v204 = vld [vmem:[%s1 + $0x480] sm:$0xff]
    %v205 = vld [vmem:[%s1 + $0x488] sm:$0xff]
    %v206 = vld [vmem:[%s1 + $0x490] sm:$0xff]
    %v207 = vld [vmem:[%s1 + $0x498] sm:$0xff]
    %v208 = vld [vmem:[%s1 + $0x4a0] sm:$0xff]
    %v209 = vld [vmem:[%s1 + $0x4a8] sm:$0xff]
    %v210 = vld [vmem:[%s1 + $0x4b0] sm:$0xff]
    %v211 = vld [vmem:[%s1 + $0x4b8] sm:$0xff]
    %v212 = vld [vmem:[%s1 + $0x4c0] sm:$0xff]
    %v213 = vld [vmem:[%s1 + $0x4c8] sm:$0xff]
    %v214 = vld [vmem:[%s1 + $0x4d0] sm:$0xff]
    %v215 = vld [vmem:[%s1 + $0x4d8] sm:$0xff]
    %v216 = vld [vmem:[%s1 + $0x4e0] sm:$0xff]
    %v217 = vld [vmem:[%s1 + $0x4e8] sm:$0xff]
    %v218 = vld [vmem:[%s1 + $0x4f0] sm:$0xff]
    %v219 = vld [vmem:[%s1 + $0x4f8] sm:$0xff]
    %v220 = vld [vmem:[%s1 + $0x500] sm:$0xff]
    %v221 = vld [vmem:[%s1 + $0x508] sm:$0xff]
    %v222 = vld [vmem:[%s1 + $0x510] sm:$0xff]
    %v223 = vld [vmem:[%s1 + $0x518] sm:$0xff]
    %v224 = vld [vmem:[%s1 + $0x520] sm:$0xff]
    %v225 = vld [vmem:[%s1 + $0x528] sm:$0xff]
    %v226 = vld [vmem:[%s1 + $0x530] sm:$0xff]
    %v227 = vld [vmem:[%s1 + $0x538] sm:$0xff]
    %v228 = vld [vmem:[%s1 + $0x540] sm:$0xff]
    %v229 = vld [vmem:[%s1 + $0x548] sm:$0xff]
    %v230 = vld [vmem:[%s1 + $0x550] sm:$0xff]
    %v231 = vld [vmem:[%s1 + $0x558] sm:$0xff]
    %v232 = vld [vmem:[%s1 + $0x560] sm:$0xff]
    %v233 = vld [vmem:[%s1 + $0x568] sm:$0xff]
    %v234 = vld [vmem:[%s1 + $0x570] sm:$0xff]
    %v235 = vld [vmem:[%s1 + $0x578] sm:$0xff]
    %v236 = vld [vmem:[%s1 + $0x580] sm:$0xff]
    %v237 = vld [vmem:[%s1 + $0x588] sm:$0xff]
    %v238 = vld [vmem:[%s1 + $0x590] sm:$0xff]
    %v239 = vld [vmem:[%s1 + $0x598] sm:$0xff]
    %v240 = vld [vmem:[%s1 + $0x5a0] sm:$0xff]
    %v241 = vld [vmem:[%s1 + $0x5a8] sm:$0xff]
    %v242 = vld [vmem:[%s1 + $0x5b0] sm:$0xff]
    %v243 = vld [vmem:[%s1 + $0x5b8] sm:$0xff]
    %v244 = vld [vmem:[%s1 + $0x5c0] sm:$0xff]
    %v245 = vld [vmem:[%s1 + $0x5c8] sm:$0xff]
    %v246 = vld [vmem:[%s1 + $0x5d0] sm:$0xff]
    %v247 = vld [vmem:[%s1 + $0x5d8] sm:$0xff]
    %v248 = vld [vmem:[%s1 + $0x5e0] sm:$0xff]
    %v249 = vld [vmem:[%s1 + $0x5e8] sm:$0xff]
    %v250 = vld [vmem:[%s1 + $0x5f0] sm:$0xff]
    %v251 = vld [vmem:[%s1 + $0x5f8] sm:$0xff]
    %v252 = vld [vmem:[%s1 + $0x600] sm:$0xff]
    %v253 = vld [vmem:[%s1 + $0x608] sm:$0xff]
    %v254 = vld [vmem:[%s1 + $0x610] sm:$0xff]
    %v255 = vld [vmem:[%s1 + $0x618] sm:$0xff]
    %v256 = vld [vmem:[%s1 + $0x620] sm:$0xff]
    %v257 = vld [vmem:[%s1 + $0x628] sm:$0xff]
    %v258 = vld [vmem:[%s1 + $0x630] sm:$0xff]
    %v259 = vld [vmem:[%s1 + $0x638] sm:$0xff]
    %v260 = vld [vmem:[%s1 + $0x640] sm:$0xff]
    %v261 = vld [vmem:[%s1 + $0x648] sm:$0xff]
    %v262 = vld [vmem:[%s1 + $0x650] sm:$0xff]
    %v263 = vld [vmem:[%s1 + $0x658] sm:$0xff]
    %v264 = vld [vmem:[%s1 + $0x660] sm:$0xff]
    %v265 = vld [vmem:[%s1 + $0x668] sm:$0xff]
    %v266 = vld [vmem:[%s1 + $0x670] sm:$0xff]
    %v267 = vld [vmem:[%s1 + $0x678] sm:$0xff]
    %v268 = vld [vmem:[%s1 + $0x680] sm:$0xff]
    %v269 = vld [vmem:[%s1 + $0x688] sm:$0xff]
    %v270 = vld [vmem:[%s1 + $0x690] sm:$0xff]
    %v271 = vld [vmem:[%s1 + $0x698] sm:$0xff]
    %v272 = vld [vmem:[%s1 + $0x6a0] sm:$0xff]
    %v273 = vld [vmem:[%s1 + $0x6a8] sm:$0xff]
    %v274 = vld [vmem:[%s1 + $0x6b0] sm:$0xff]
    %v275 = vld [vmem:[%s1 + $0x6b8] sm:$0xff]
    %v276 = vld [vmem:[%s1 + $0x6c0] sm:$0xff]
    %v277 = vld [vmem:[%s1 + $0x6c8] sm:$0xff]
    %v278 = vld [vmem:[%s1 + $0x6d0] sm:$0xff]
    %v279 = vld [vmem:[%s1 + $0x6d8] sm:$0xff]
    %v280 = vld [vmem:[%s1 + $0x6e0] sm:$0xff]
    %v281 = vld [vmem:[%s1 + $0x6e8] sm:$0xff]
    %v282 = vld [vmem:[%s1 + $0x6f0] sm:$0xff]
    %v283 = vld [vmem:[%s1 + $0x6f8] sm:$0xff]
    %v284 = vld [vmem:[%s1 + $0x700] sm:$0xff]
    %v285 = vld [vmem:[%s1 + $0x708] sm:$0xff]
    %v286 = vld [vmem:[%s1 + $0x710] sm:$0xff]
    %v287 = vld [vmem:[%s1 + $0x718] sm:$0xff]
    %v288 = vld [vmem:[%s1 + $0x720] sm:$0xff]
    %v289 = vld [vmem:[%s1 + $0x728] sm:$0xff]
    %v290 = vld [vmem:[%s1 + $0x730] sm:$0xff]
    %v291 = vld [vmem:[%s1 + $0x738] sm:$0xff]
    %v292 = vld [vmem:[%s1 + $0x740] sm:$0xff]
    %v293 = vld [vmem:[%s1 + $0x748] sm:$0xff]
    %v294 = vld [vmem:[%s1 + $0x750] sm:$0xff]
    %v295 = vld [vmem:[%s1 + $0x758] sm:$0xff]
    %v296 = vld [vmem:[%s1 + $0x760] sm:$0xff]
    %v297 = vld [vmem:[%s1 + $0x768] sm:$0xff]
    %v298 = vld [vmem:[%s1 + $0x770] sm:$0xff]
    %v299 = vld [vmem:[%s1 + $0x778] sm:$0xff]
    %v300 = vld [vmem:[%s1 + $0x780] sm:$0xff]
    %v301 = vld [vmem:[%s1 + $0x788] sm:$0xff]
    %v302 = vld [vmem:[%s1 + $0x790] sm:$0xff]
    %v303 = vld [vmem:[%s1 + $0x798] sm:$0xff]
    %v304 = vld [vmem:[%s1 + $0x7a0] sm:$0xff]
    %v305 = vld [vmem:[%s1 + $0x7a8] sm:$0xff]
    %v306 = vld [vmem:[%s1 + $0x7b0] sm:$0xff]
    %v307 = vld [vmem:[%s1 + $0x7b8] sm:$0xff]
    %v308 = vld [vmem:[%s1 + $0x7c0] sm:$0xff]
    %v309 = vld [vmem:[%s1 + $0x7c8] sm:$0xff]
    %v310 = vld [vmem:[%s1 + $0x7d0] sm:$0xff]
    %v311 = vld [vmem:[%s1 + $0x7d8] sm:$0xff]
    %v312 = vld [vmem:[%s1 + $0x7e0] sm:$0xff]
    %v313 = vld [vmem:[%s1 + $0x7e8] sm:$0xff]
    %v314 = vld [vmem:[%s1 + $0x7f0] sm:$0xff]
    %v315 = vld [vmem:[%s1 + $0x7f8] sm:$0xff]
    %v316 = vld [vmem:[%s1 + $0x800] sm:$0xff]
    %v317 = vld [vmem:[%s1 + $0x808] sm:$0xff]
    %v318 = vld [vmem:[%s1 + $0x810] sm:$0xff]
    %v319 = vld [vmem:[%s1 + $0x818] sm:$0xff]
    %v320 = vld [vmem:[%s1 + $0x820] sm:$0xff]
    %v321 = vld [vmem:[%s1 + $0x828] sm:$0xff]
    %v322 = vld [vmem:[%s1 + $0x830] sm:$0xff]
    %v323 = vld [vmem:[%s1 + $0x838] sm:$0xff]
    %v324 = vld [vmem:[%s1 + $0x840] sm:$0xff]
    %v325 = vld [vmem:[%s1 + $0x848] sm:$0xff]
    %v326 = vld [vmem:[%s1 + $0x850] sm:$0xff]
    %v327 = vld [vmem:[%s1 + $0x858] sm:$0xff]
    %v328 = vld [vmem:[%s1 + $0x860] sm:$0xff]
    %v329 = vld [vmem:[%s1 + $0x868] sm:$0xff]
    %v330 = vld [vmem:[%s1 + $0x870] sm:$0xff]
    %v331 = vld [vmem:[%s1 + $0x878] sm:$0xff]
    %v332 = vld [vmem:[%s1 + $0x880] sm:$0xff]
    %v333 = vld [vmem:[%s1 + $0x888] sm:$0xff]
    %v334 = vld [vmem:[%s1 + $0x890] sm:$0xff]
    %v335 = vld [vmem:[%s1 + $0x898] sm:$0xff]
    %v336 = vld [vmem:[%s1 + $0x8a0] sm:$0xff]
    %v337 = vld [vmem:[%s1 + $0x8a8] sm:$0xff]
    %v338 = vld [vmem:[%s1 + $0x8b0] sm:$0xff]
    %v339 = vld [vmem:[%s1 + $0x8b8] sm:$0xff]
    %v340 = vld [vmem:[%s1 + $0x8c0] sm:$0xff]
    %v341 = vld [vmem:[%s1 + $0x8c8] sm:$0xff]
    %v342 = vld [vmem:[%s1 + $0x8d0] sm:$0xff]
    %v343 = vld [vmem:[%s1 + $0x8d8] sm:$0xff]
    %v344 = vld [vmem:[%s1 + $0x8e0] sm:$0xff]
    %v345 = vld [vmem:[%s1 + $0x8e8] sm:$0xff]
    %v346 = vld [vmem:[%s1 + $0x8f0] sm:$0xff]
    %v347 = vld [vmem:[%s1 + $0x8f8] sm:$0xff]
    %v348 = vld [vmem:[%s1 + $0x900] sm:$0xff]
    %v349 = vld [vmem:[%s1 + $0x908] sm:$0xff]
    %v350 = vld [vmem:[%s1 + $0x910] sm:$0xff]
    %v351 = vld [vmem:[%s1 + $0x918] sm:$0xff]
    %v352 = vld [vmem:[%s1 + $0x920] sm:$0xff]
    %v353 = vld [vmem:[%s1 + $0x928] sm:$0xff]
    %v354 = vld [vmem:[%s1 + $0x930] sm:$0xff]
    %v355 = vld [vmem:[%s1 + $0x938] sm:$0xff]
    %v356 = vld [vmem:[%s1 + $0x940] sm:$0xff]
    %v357 = vld [vmem:[%s1 + $0x948] sm:$0xff]
    %v358 = vld [vmem:[%s1 + $0x950] sm:$0xff]
    %v359 = vld [vmem:[%s1 + $0x958] sm:$0xff]
    %v360 = vld [vmem:[%s1 + $0x960] sm:$0xff]
    %v361 = vld [vmem:[%s1 + $0x968] sm:$0xff]
    %v362 = vld [vmem:[%s1 + $0x970] sm:$0xff]
    %v363 = vld [vmem:[%s1 + $0x978] sm:$0xff]
    %v364 = vld [vmem:[%s1 + $0x980] sm:$0xff]
    %v365 = vld [vmem:[%s1 + $0x988] sm:$0xff]
    %v366 = vld [vmem:[%s1 + $0x990] sm:$0xff]
    %v367 = vld [vmem:[%s1 + $0x998] sm:$0xff]
    %v368 = vld [vmem:[%s1 + $0x9a0] sm:$0xff]
    %v369 = vld [vmem:[%s1 + $0x9a8] sm:$0xff]
    %v370 = vld [vmem:[%s1 + $0x9b0] sm:$0xff]
    %v371 = vld [vmem:[%s1 + $0x9b8] sm:$0xff]
    %v372 = vld [vmem:[%s1 + $0x9c0] sm:$0xff]
    %v373 = vld [vmem:[%s1 + $0x9c8] sm:$0xff]
    %v374 = vld [vmem:[%s1 + $0x9d0] sm:$0xff]
    %v375 = vld [vmem:[%s1 + $0x9d8] sm:$0xff]
    %v376 = vld [vmem:[%s1 + $0x9e0] sm:$0xff]
    %v377 = vld [vmem:[%s1 + $0x9e8] sm:$0xff]
    %v378 = vld [vmem:[%s1 + $0x9f0] sm:$0xff]
    %v379 = vld [vmem:[%s1 + $0x9f8] sm:$0xff]
    %v380 = vld [vmem:[%s1 + $0xa00] sm:$0xff]
    %v381 = vld [vmem:[%s1 + $0xa08] sm:$0xff]
    %v382 = vld [vmem:[%s1 + $0xa10] sm:$0xff]
    %v383 = vld [vmem:[%s1 + $0xa18] sm:$0xff]
    %v384 = vld [vmem:[%s1 + $0xa20] sm:$0xff]
    %v385 = vld [vmem:[%s1 + $0xa28] sm:$0xff]
    %v386 = vld [vmem:[%s1 + $0xa30] sm:$0xff]
    %v387 = vld [vmem:[%s1 + $0xa38] sm:$0xff]
    %v388 = vld [vmem:[%s1 + $0xa40] sm:$0xff]
    %v389 = vld [vmem:[%s1 + $0xa48] sm:$0xff]
    %v390 = vld [vmem:[%s1 + $0xa50] sm:$0xff]
    %v391 = vld [vmem:[%s1 + $0xa58] sm:$0xff]
    %v392 = vld [vmem:[%s1 + $0xa60] sm:$0xff]
    %v393 = vld [vmem:[%s1 + $0xa68] sm:$0xff]
    %v394 = vld [vmem:[%s1 + $0xa70] sm:$0xff]
    %v395 = vld [vmem:[%s1 + $0xa78] sm:$0xff]
    %v396 = vld [vmem:[%s1 + $0xa80] sm:$0xff]
    %v397 = vld [vmem:[%s1 + $0xa88] sm:$0xff]
    %v398 = vld [vmem:[%s1 + $0xa90] sm:$0xff]
    %v399 = vld [vmem:[%s1 + $0xa98] sm:$0xff]
    %v400 = vld [vmem:[%s1 + $0xaa0] sm:$0xff]
    %v401 = vld [vmem:[%s1 + $0xaa8] sm:$0xff]
    %v402 = vld [vmem:[%s1 + $0xab0] sm:$0xff]
    %v403 = vld [vmem:[%s1 + $0xab8] sm:$0xff]
    %v404 = vld [vmem:[%s1 + $0xac0] sm:$0xff]
    %v405 = vld [vmem:[%s1 + $0xac8] sm:$0xff]
    %v406 = vld [vmem:[%s1 + $0xad0] sm:$0xff]
    %v407 = vld [vmem:[%s1 + $0xad8] sm:$0xff]
    %v408 = vld [vmem:[%s1 + $0xae0] sm:$0xff]
    %v409 = vld [vmem:[%s1 + $0xae8] sm:$0xff]
    %v410 = vld [vmem:[%s1 + $0xaf0] sm:$0xff]
    %v411 = vld [vmem:[%s1 + $0xaf8] sm:$0xff]
    %v412 = vld [vmem:[%s1 + $0xb00] sm:$0xff]
    %v413 = vld [vmem:[%s1 + $0xb08] sm:$0xff]
    %v414 = vld [vmem:[%s1 + $0xb10] sm:$0xff]
    %v415 = vld [vmem:[%s1 + $0xb18] sm:$0xff]
    %v416 = vld [vmem:[%s1 + $0xb20] sm:$0xff]
    %v417 = vld [vmem:[%s1 + $0xb28] sm:$0xff]
    %v418 = vld [vmem:[%s1 + $0xb30] sm:$0xff]
    %v419 = vld [vmem:[%s1 + $0xb38] sm:$0xff]
    %v420 = vld [vmem:[%s1 + $0xb40] sm:$0xff]
    %v421 = vld [vmem:[%s1 + $0xb48] sm:$0xff]
    %v422 = vld [vmem:[%s1 + $0xb50] sm:$0xff]
    %v423 = vld [vmem:[%s1 + $0xb58] sm:$0xff]
    %v424 = vld [vmem:[%s1 + $0xb60] sm:$0xff]
    %v425 = vld [vmem:[%s1 + $0xb68] sm:$0xff]
    %v426 = vld [vmem:[%s1 + $0xb70] sm:$0xff]
    %v427 = vld [vmem:[%s1 + $0xb78] sm:$0xff]
    %v428 = vld [vmem:[%s1 + $0xb80] sm:$0xff]
    %v429 = vld [vmem:[%s1 + $0xb88] sm:$0xff]
    %v430 = vld [vmem:[%s1 + $0xb90] sm:$0xff]
    %v431 = vld [vmem:[%s1 + $0xb98] sm:$0xff]
    %v432 = vld [vmem:[%s1 + $0xba0] sm:$0xff]
    %v433 = vld [vmem:[%s1 + $0xba8] sm:$0xff]
    %v434 = vld [vmem:[%s1 + $0xbb0] sm:$0xff]
    %v435 = vld [vmem:[%s1 + $0xbb8] sm:$0xff]
    %v436 = vld [vmem:[%s1 + $0xbc0] sm:$0xff]
    %v437 = vld [vmem:[%s1 + $0xbc8] sm:$0xff]
    %v438 = vld [vmem:[%s1 + $0xbd0] sm:$0xff]
    %v439 = vld [vmem:[%s1 + $0xbd8] sm:$0xff]
    %v440 = vld [vmem:[%s1 + $0xbe0] sm:$0xff]
    %v441 = vld [vmem:[%s1 + $0xbe8] sm:$0xff]
    %v442 = vld [vmem:[%s1 + $0xbf0] sm:$0xff]
    %v443 = vld [vmem:[%s1 + $0xbf8] sm:$0xff]
    %v444 = vld [vmem:[%s1 + $0xc00] sm:$0xff]
    %v445 = vld [vmem:[%s1 + $0xc08] sm:$0xff]
    %v446 = vld [vmem:[%s1 + $0xc10] sm:$0xff]
    %v447 = vld [vmem:[%s1 + $0xc18] sm:$0xff]
    %v448 = vld [vmem:[%s1 + $0xc20] sm:$0xff]
    %v449 = vld [vmem:[%s1 + $0xc28] sm:$0xff]
    %v450 = vld [vmem:[%s1 + $0xc30] sm:$0xff]
    %v451 = vld [vmem:[%s1 + $0xc38] sm:$0xff]
    %v452 = vld [vmem:[%s1 + $0xc40] sm:$0xff]
    %v453 = vld [vmem:[%s1 + $0xc48] sm:$0xff]
    %v454 = vld [vmem:[%s1 + $0xc50] sm:$0xff]
    %v455 = vld [vmem:[%s1 + $0xc58] sm:$0xff]
    %v456 = vld [vmem:[%s1 + $0xc60] sm:$0xff]
    %v457 = vld [vmem:[%s1 + $0xc68] sm:$0xff]
    %v458 = vld [vmem:[%s1 + $0xc70] sm:$0xff]
    %v459 = vld [vmem:[%s1 + $0xc78] sm:$0xff]
    %v460 = vld [vmem:[%s1 + $0xc80] sm:$0xff]
    %v461 = vld [vmem:[%s1 + $0xc88] sm:$0xff]
    %v462 = vld [vmem:[%s1 + $0xc90] sm:$0xff]
    %v463 = vld [vmem:[%s1 + $0xc98] sm:$0xff]
    %v464 = vld [vmem:[%s1 + $0xca0] sm:$0xff]
    %v465 = vld [vmem:[%s1 + $0xca8] sm:$0xff]
    %v466 = vld [vmem:[%s1 + $0xcb0] sm:$0xff]
    %v467 = vld [vmem:[%s1 + $0xcb8] sm:$0xff]
    %v468 = vld [vmem:[%s1 + $0xcc0] sm:$0xff]
    %v469 = vld [vmem:[%s1 + $0xcc8] sm:$0xff]
    %v470 = vld [vmem:[%s1 + $0xcd0] sm:$0xff]
    %v471 = vld [vmem:[%s1 + $0xcd8] sm:$0xff]
    %v472 = vld [vmem:[%s1 + $0xce0] sm:$0xff]
    %v473 = vld [vmem:[%s1 + $0xce8] sm:$0xff]
    %v474 = vld [vmem:[%s1 + $0xcf0] sm:$0xff]
    %v475 = vld [vmem:[%s1 + $0xcf8] sm:$0xff]
    %v476 = vld [vmem:[%s1 + $0xd00] sm:$0xff]
    %v477 = vld [vmem:[%s1 + $0xd08] sm:$0xff]
    %v478 = vld [vmem:[%s1 + $0xd10] sm:$0xff]
    %v479 = vld [vmem:[%s1 + $0xd18] sm:$0xff]
    %v480 = vld [vmem:[%s1 + $0xd20] sm:$0xff]
    %v481 = vld [vmem:[%s1 + $0xd28] sm:$0xff]
    %v482 = vld [vmem:[%s1 + $0xd30] sm:$0xff]
    %v483 = vld [vmem:[%s1 + $0xd38] sm:$0xff]
    %v484 = vld [vmem:[%s1 + $0xd40] sm:$0xff]
    %v485 = vld [vmem:[%s1 + $0xd48] sm:$0xff]
    %v486 = vld [vmem:[%s1 + $0xd50] sm:$0xff]
    %v487 = vld [vmem:[%s1 + $0xd58] sm:$0xff]
    %v488 = vld [vmem:[%s1 + $0xd60] sm:$0xff]
    %v489 = vld [vmem:[%s1 + $0xd68] sm:$0xff]
    %v490 = vld [vmem:[%s1 + $0xd70] sm:$0xff]
    %v491 = vld [vmem:[%s1 + $0xd78] sm:$0xff]
    %v492 = vld [vmem:[%s1 + $0xd80] sm:$0xff]
    %v493 = vld [vmem:[%s1 + $0xd88] sm:$0xff]
    %v494 = vld [vmem:[%s1 + $0xd90] sm:$0xff]
    %v495 = vld [vmem:[%s1 + $0xd98] sm:$0xff]
    %v496 = vld [vmem:[%s1 + $0xda0] sm:$0xff]
    %v497 = vld [vmem:[%s1 + $0xda8] sm:$0xff]
    %v498 = vld [vmem:[%s1 + $0xdb0] sm:$0xff]
    %v499 = vld [vmem:[%s1 + $0xdb8] sm:$0xff]
    %v500 = vld [vmem:[%s1 + $0xdc0] sm:$0xff]
    %v501 = vld [vmem:[%s1 + $0xdc8] sm:$0xff]
    %v502 = vld [vmem:[%s1 + $0xdd0] sm:$0xff]
    %v503 = vld [vmem:[%s1 + $0xdd8] sm:$0xff]
    %v504 = vld [vmem:[%s1 + $0xde0] sm:$0xff]
    %v505 = vld [vmem:[%s1 + $0xde8] sm:$0xff]
    %v506 = vld [vmem:[%s1 + $0xdf0] sm:$0xff]
    %v507 = vld [vmem:[%s1 + $0xdf8] sm:$0xff]
    %v508 = vld [vmem:[%s1 + $0xe00] sm:$0xff]
    %v509 = vld [vmem:[%s1 + $0xe08] sm:$0xff]
    %v510 = vld [vmem:[%s1 + $0xe10] sm:$0xff]
    %v511 = vld [vmem:[%s1 + $0xe18] sm:$0xff]
    %v512 = vld [vmem:[%s1 + $0xe20] sm:$0xff]
    %v513 = vld [vmem:[%s1 + $0xe28] sm:$0xff]
    %v514 = vld [vmem:[%s1 + $0xe30] sm:$0xff]
    %v515 = vld [vmem:[%s1 + $0xe38] sm:$0xff]
    %v516 = vld [vmem:[%s1 + $0xe40] sm:$0xff]
    %v517 = vld [vmem:[%s1 + $0xe48] sm:$0xff]
    %v518 = vld [vmem:[%s1 + $0xe50] sm:$0xff]
    %v519 = vld [vmem:[%s1 + $0xe58] sm:$0xff]
    %v520 = vld [vmem:[%s1 + $0xe60] sm:$0xff]
    %v521 = vld [vmem:[%s1 + $0xe68] sm:$0xff]
    %v522 = vld [vmem:[%s1 + $0xe70] sm:$0xff]
    %v523 = vld [vmem:[%s1 + $0xe78] sm:$0xff]
    %v524 = vld [vmem:[%s1 + $0xe80] sm:$0xff]
    %v525 = vld [vmem:[%s1 + $0xe88] sm:$0xff]
    %v526 = vld [vmem:[%s1 + $0xe90] sm:$0xff]
    %v527 = vld [vmem:[%s1 + $0xe98] sm:$0xff]
    %v528 = vld [vmem:[%s1 + $0xea0] sm:$0xff]
    %v529 = vld [vmem:[%s1 + $0xea8] sm:$0xff]
    %v530 = vld [vmem:[%s1 + $0xeb0] sm:$0xff]
    %v531 = vld [vmem:[%s1 + $0xeb8] sm:$0xff]
    %v532 = vld [vmem:[%s1 + $0xec0] sm:$0xff]
    %v533 = vld [vmem:[%s1 + $0xec8] sm:$0xff]
    %v534 = vld [vmem:[%s1 + $0xed0] sm:$0xff]
    %v535 = vld [vmem:[%s1 + $0xed8] sm:$0xff]
    %v536 = vld [vmem:[%s1 + $0xee0] sm:$0xff]
    %v537 = vld [vmem:[%s1 + $0xee8] sm:$0xff]
    %v538 = vld [vmem:[%s1 + $0xef0] sm:$0xff]
    %v539 = vld [vmem:[%s1 + $0xef8] sm:$0xff]
    %v540 = vld [vmem:[%s1 + $0xf00] sm:$0xff]
    %v541 = vld [vmem:[%s1 + $0xf08] sm:$0xff]
    %v542 = vld [vmem:[%s1 + $0xf10] sm:$0xff]
    %v543 = vld [vmem:[%s1 + $0xf18] sm:$0xff]
    %v544 = vld [vmem:[%s1 + $0xf20] sm:$0xff]
    %v545 = vld [vmem:[%s1 + $0xf28] sm:$0xff]
    %v546 = vld [vmem:[%s1 + $0xf30] sm:$0xff]
    %v547 = vld [vmem:[%s1 + $0xf38] sm:$0xff]
    %v548 = vld [vmem:[%s1 + $0xf40] sm:$0xff]
    %v549 = vld [vmem:[%s1 + $0xf48] sm:$0xff]
    %v550 = vld [vmem:[%s1 + $0xf50] sm:$0xff]
    %v551 = vld [vmem:[%s1 + $0xf58] sm:$0xff]
    %v552 = vld [vmem:[%s1 + $0xf60] sm:$0xff]
    %v553 = vld [vmem:[%s1 + $0xf68] sm:$0xff]
    %v554 = vld [vmem:[%s1 + $0xf70] sm:$0xff]
    %v555 = vld [vmem:[%s1 + $0xf78] sm:$0xff]
    %v556 = vld [vmem:[%s1 + $0xf80] sm:$0xff]
    %v557 = vld [vmem:[%s1 + $0xf88] sm:$0xff]
    %v558 = vld [vmem:[%s1 + $0xf90] sm:$0xff]
    %v559 = vld [vmem:[%s1 + $0xf98] sm:$0xff]
    %v560 = vld [vmem:[%s1 + $0xfa0] sm:$0xff]
    %v561 = vld [vmem:[%s1 + $0xfa8] sm:$0xff]
    %v562 = vld [vmem:[%s1 + $0xfb0] sm:$0xff]
    %v563 = vld [vmem:[%s1 + $0xfb8] sm:$0xff]
    %v564 = vld [vmem:[%s1 + $0xfc0] sm:$0xff]
    %v565 = vld [vmem:[%s1 + $0xfc8] sm:$0xff]
    %v566 = vld [vmem:[%s1 + $0xfd0] sm:$0xff]
    %v567 = vld [vmem:[%s1 + $0xfd8] sm:$0xff]
    %v568 = vld [vmem:[%s1 + $0xfe0] sm:$0xff]
    %v569 = vld [vmem:[%s1 + $0xfe8] sm:$0xff]
    %v570 = vld [vmem:[%s1 + $0xff0] sm:$0xff]
    %v571 = vld [vmem:[%s1 + $0xff8] sm:$0xff]
    %v572 = vld [vmem:[%s1 + $0x1000] sm:$0xff]
    %v573 = vld [vmem:[%s1 + $0x1008] sm:$0xff]
    %v574 = vld [vmem:[%s1 + $0x1010] sm:$0xff]
    %v575 = vld [vmem:[%s1 + $0x1018] sm:$0xff]
    %v576 = vld [vmem:[%s1 + $0x1020] sm:$0xff]
    %v577 = vld [vmem:[%s1 + $0x1028] sm:$0xff]
    %v578 = vld [vmem:[%s1 + $0x1030] sm:$0xff]
    %v579 = vld [vmem:[%s1 + $0x1038] sm:$0xff]
    %v580 = vld [vmem:[%s1 + $0x1040] sm:$0xff]
    %v581 = vld [vmem:[%s1 + $0x1048] sm:$0xff]
    %v582 = vld [vmem:[%s1 + $0x1050] sm:$0xff]
    %v583 = vld [vmem:[%s1 + $0x1058] sm:$0xff]
    %v584 = vld [vmem:[%s1 + $0x1060] sm:$0xff]
    %v585 = vld [vmem:[%s1 + $0x1068] sm:$0xff]
    %v586 = vld [vmem:[%s1 + $0x1070] sm:$0xff]
    %v587 = vld [vmem:[%s1 + $0x1078] sm:$0xff]
    %v588 = vld [vmem:[%s1 + $0x1080] sm:$0xff]
    %v589 = vld [vmem:[%s1 + $0x1088] sm:$0xff]
    %v590 = vld [vmem:[%s1 + $0x1090] sm:$0xff]
    %v591 = vld [vmem:[%s1 + $0x1098] sm:$0xff]
    %v592 = vld [vmem:[%s1 + $0x10a0] sm:$0xff]
    %v593 = vld [vmem:[%s1 + $0x10a8] sm:$0xff]
    %v594 = vld [vmem:[%s1 + $0x10b0] sm:$0xff]
    %v595 = vld [vmem:[%s1 + $0x10b8] sm:$0xff]
    %v596 = vld [vmem:[%s1 + $0x10c0] sm:$0xff]
    %v597 = vld [vmem:[%s1 + $0x10c8] sm:$0xff]
    %v598 = vld [vmem:[%s1 + $0x10d0] sm:$0xff]
    %v599 = vld [vmem:[%s1 + $0x10d8] sm:$0xff]
    %v600 = vld [vmem:[%s1 + $0x10e0] sm:$0xff]
    %v601 = vld [vmem:[%s1 + $0x10e8] sm:$0xff]
    %v602 = vld [vmem:[%s1 + $0x10f0] sm:$0xff]
    %v603 = vld [vmem:[%s1 + $0x10f8] sm:$0xff]
    %v604 = vld [vmem:[%s1 + $0x1100] sm:$0xff]
    %v605 = vld [vmem:[%s1 + $0x1108] sm:$0xff]
    %v606 = vld [vmem:[%s1 + $0x1110] sm:$0xff]
    %v607 = vld [vmem:[%s1 + $0x1118] sm:$0xff]
    %v608 = vld [vmem:[%s1 + $0x1120] sm:$0xff]
    %v609 = vld [vmem:[%s1 + $0x1128] sm:$0xff]
    %v610 = vld [vmem:[%s1 + $0x1130] sm:$0xff]
    %v611 = vld [vmem:[%s1 + $0x1138] sm:$0xff]
    %v612 = vld [vmem:[%s1 + $0x1140] sm:$0xff]
    %v613 = vld [vmem:[%s1 + $0x1148] sm:$0xff]
    %v614 = vld [vmem:[%s1 + $0x1150] sm:$0xff]
    %v615 = vld [vmem:[%s1 + $0x1158] sm:$0xff]
    %v616 = vld [vmem:[%s1 + $0x1160] sm:$0xff]
    %v617 = vld [vmem:[%s1 + $0x1168] sm:$0xff]
    %v618 = vld [vmem:[%s1 + $0x1170] sm:$0xff]
    %v619 = vld [vmem:[%s1 + $0x1178] sm:$0xff]
    %v620 = vld [vmem:[%s1 + $0x1180] sm:$0xff]
    %v621 = vld [vmem:[%s1 + $0x1188] sm:$0xff]
    %v622 = vld [vmem:[%s1 + $0x1190] sm:$0xff]
    %v623 = vld [vmem:[%s1 + $0x1198] sm:$0xff]
    %v624 = vld [vmem:[%s1 + $0x11a0] sm:$0xff]
    %v625 = vld [vmem:[%s1 + $0x11a8] sm:$0xff]
    %v626 = vld [vmem:[%s1 + $0x11b0] sm:$0xff]
    %v627 = vld [vmem:[%s1 + $0x11b8] sm:$0xff]
    %v628 = vld [vmem:[%s1 + $0x11c0] sm:$0xff]
    %v629 = vld [vmem:[%s1 + $0x11c8] sm:$0xff]
    %v630 = vld [vmem:[%s1 + $0x11d0] sm:$0xff]
    %v631 = vld [vmem:[%s1 + $0x11d8] sm:$0xff]
    %v632 = vld [vmem:[%s1 + $0x11e0] sm:$0xff]
    %v633 = vld [vmem:[%s1 + $0x11e8] sm:$0xff]
    %v634 = vld [vmem:[%s1 + $0x11f0] sm:$0xff]
    %v635 = vld [vmem:[%s1 + $0x11f8] sm:$0xff]
    %v636 = vld [vmem:[%s1 + $0x1200] sm:$0xff]
    %v637 = vld [vmem:[%s1 + $0x1208] sm:$0xff]
    %v638 = vld [vmem:[%s1 + $0x1210] sm:$0xff]
    %v639 = vld [vmem:[%s1 + $0x1218] sm:$0xff]
    %v640 = vld [vmem:[%s1 + $0x1220] sm:$0xff]
    %v641 = vld [vmem:[%s1 + $0x1228] sm:$0xff]
    %v642 = vld [vmem:[%s1 + $0x1230] sm:$0xff]
    %v643 = vld [vmem:[%s1 + $0x1238] sm:$0xff]
    %v644 = vld [vmem:[%s1 + $0x1240] sm:$0xff]
    %v645 = vld [vmem:[%s1 + $0x1248] sm:$0xff]
    %v646 = vld [vmem:[%s1 + $0x1250] sm:$0xff]
    %v647 = vld [vmem:[%s1 + $0x1258] sm:$0xff]
    %v648 = vld [vmem:[%s1 + $0x1260] sm:$0xff]
    %v649 = vld [vmem:[%s1 + $0x1268] sm:$0xff]
    %v650 = vld [vmem:[%s1 + $0x1270] sm:$0xff]
    %v651 = vld [vmem:[%s1 + $0x1278] sm:$0xff]
    %v652 = vld [vmem:[%s1 + $0x1280] sm:$0xff]
    %v653 = vld [vmem:[%s1 + $0x1288] sm:$0xff]
    %v654 = vld [vmem:[%s1 + $0x1290] sm:$0xff]
    %v655 = vld [vmem:[%s1 + $0x1298] sm:$0xff]
    %v656 = vld [vmem:[%s1 + $0x12a0] sm:$0xff]
    %v657 = vld [vmem:[%s1 + $0x12a8] sm:$0xff]
    %v658 = vld [vmem:[%s1 + $0x12b0] sm:$0xff]
    %v659 = vld [vmem:[%s1 + $0x12b8] sm:$0xff]
    %v660 = vld [vmem:[%s1 + $0x12c0] sm:$0xff]
    %v661 = vld [vmem:[%s1 + $0x12c8] sm:$0xff]
    %v662 = vld [vmem:[%s1 + $0x12d0] sm:$0xff]
    %v663 = vld [vmem:[%s1 + $0x12d8] sm:$0xff]
    %v664 = vld [vmem:[%s1 + $0x12e0] sm:$0xff]
    %v665 = vld [vmem:[%s1 + $0x12e8] sm:$0xff]
    %v666 = vld [vmem:[%s1 + $0x12f0] sm:$0xff]
    %v667 = vld [vmem:[%s1 + $0x12f8] sm:$0xff]
    %v668 = vld [vmem:[%s1 + $0x1300] sm:$0xff]
    %v669 = vld [vmem:[%s1 + $0x1308] sm:$0xff]
    %v670 = vld [vmem:[%s1 + $0x1310] sm:$0xff]
    %v671 = vld [vmem:[%s1 + $0x1318] sm:$0xff]
    %v672 = vld [vmem:[%s1 + $0x1320] sm:$0xff]
    %v673 = vld [vmem:[%s1 + $0x1328] sm:$0xff]
    %v674 = vld [vmem:[%s1 + $0x1330] sm:$0xff]
    %v675 = vld [vmem:[%s1 + $0x1338] sm:$0xff]
    %v676 = vld [vmem:[%s1 + $0x1340] sm:$0xff]
    %v677 = vld [vmem:[%s1 + $0x1348] sm:$0xff]
    %v678 = vld [vmem:[%s1 + $0x1350] sm:$0xff]
    %v679 = vld [vmem:[%s1 + $0x1358] sm:$0xff]
    %v680 = vld [vmem:[%s1 + $0x1360] sm:$0xff]
    %v681 = vld [vmem:[%s1 + $0x1368] sm:$0xff]
    %v682 = vld [vmem:[%s1 + $0x1370] sm:$0xff]
    %v683 = vld [vmem:[%s1 + $0x1378] sm:$0xff]
    %v684 = vld [vmem:[%s1 + $0x1380] sm:$0xff]
    %v685 = vld [vmem:[%s1 + $0x1388] sm:$0xff]
    %v686 = vld [vmem:[%s1 + $0x1390] sm:$0xff]
    %v687 = vld [vmem:[%s1 + $0x1398] sm:$0xff]
    %v688 = vld [vmem:[%s1 + $0x13a0] sm:$0xff]
    %v689 = vld [vmem:[%s1 + $0x13a8] sm:$0xff]
    %v690 = vld [vmem:[%s1 + $0x13b0] sm:$0xff]
    %v691 = vld [vmem:[%s1 + $0x13b8] sm:$0xff]
    %v692 = vld [vmem:[%s1 + $0x13c0] sm:$0xff]
    %v693 = vld [vmem:[%s1 + $0x13c8] sm:$0xff]
    %v694 = vld [vmem:[%s1 + $0x13d0] sm:$0xff]
    %v695 = vld [vmem:[%s1 + $0x13d8] sm:$0xff]
    %v696 = vld [vmem:[%s1 + $0x13e0] sm:$0xff]
    %v697 = vld [vmem:[%s1 + $0x13e8] sm:$0xff]
    %v698 = vld [vmem:[%s1 + $0x13f0] sm:$0xff]
    %v699 = vld [vmem:[%s1 + $0x13f8] sm:$0xff]
    %v700 = vld [vmem:[%s1 + $0x1400] sm:$0xff]
    %v701 = vld [vmem:[%s1 + $0x1408] sm:$0xff]
    %v702 = vld [vmem:[%s1 + $0x1410] sm:$0xff]
    %v703 = vld [vmem:[%s1 + $0x1418] sm:$0xff]
    %v704 = vld [vmem:[%s1 + $0x1420] sm:$0xff]
    %v705 = vld [vmem:[%s1 + $0x1428] sm:$0xff]
    %v706 = vld [vmem:[%s1 + $0x1430] sm:$0xff]
    %v707 = vld [vmem:[%s1 + $0x1438] sm:$0xff]
    %v708 = vld [vmem:[%s1 + $0x1440] sm:$0xff]
    %v709 = vld [vmem:[%s1 + $0x1448] sm:$0xff]
    %v710 = vld [vmem:[%s1 + $0x1450] sm:$0xff]
    %v711 = vld [vmem:[%s1 + $0x1458] sm:$0xff]
    %v712 = vld [vmem:[%s1 + $0x1460] sm:$0xff]
    %v713 = vld [vmem:[%s1 + $0x1468] sm:$0xff]
    %v714 = vld [vmem:[%s1 + $0x1470] sm:$0xff]
    %v715 = vld [vmem:[%s1 + $0x1478] sm:$0xff]
    %v716 = vld [vmem:[%s1 + $0x1480] sm:$0xff]
    %v717 = vld [vmem:[%s1 + $0x1488] sm:$0xff]
    %v718 = vld [vmem:[%s1 + $0x1490] sm:$0xff]
    %v719 = vld [vmem:[%s1 + $0x1498] sm:$0xff]
    %v720 = vld [vmem:[%s1 + $0x14a0] sm:$0xff]
    %v721 = vld [vmem:[%s1 + $0x14a8] sm:$0xff]
    %v722 = vld [vmem:[%s1 + $0x14b0] sm:$0xff]
    %v723 = vld [vmem:[%s1 + $0x14b8] sm:$0xff]
    %v724 = vld [vmem:[%s1 + $0x14c0] sm:$0xff]
    %v725 = vld [vmem:[%s1 + $0x14c8] sm:$0xff]
    %v726 = vld [vmem:[%s1 + $0x14d0] sm:$0xff]
    %v727 = vld [vmem:[%s1 + $0x14d8] sm:$0xff]
    %v728 = vld [vmem:[%s1 + $0x14e0] sm:$0xff]
    %v729 = vld [vmem:[%s1 + $0x14e8] sm:$0xff]
    %v730 = vld [vmem:[%s1 + $0x14f0] sm:$0xff]
    %v731 = vld [vmem:[%s1 + $0x14f8] sm:$0xff]
    %v732 = vld [vmem:[%s1 + $0x1500] sm:$0xff]
    %v733 = vld [vmem:[%s1 + $0x1508] sm:$0xff]
    %v734 = vld [vmem:[%s1 + $0x1510] sm:$0xff]
    %v735 = vld [vmem:[%s1 + $0x1518] sm:$0xff]
    %v736 = vld [vmem:[%s1 + $0x1520] sm:$0xff]
    %v737 = vld [vmem:[%s1 + $0x1528] sm:$0xff]
    %v738 = vld [vmem:[%s1 + $0x1530] sm:$0xff]
    %v739 = vld [vmem:[%s1 + $0x1538] sm:$0xff]
    %v740 = vld [vmem:[%s1 + $0x1540] sm:$0xff]
    %v741 = vld [vmem:[%s1 + $0x1548] sm:$0xff]
    %v742 = vld [vmem:[%s1 + $0x1550] sm:$0xff]
    %v743 = vld [vmem:[%s1 + $0x1558] sm:$0xff]
    %v744 = vld [vmem:[%s1 + $0x1560] sm:$0xff]
    %v745 = vld [vmem:[%s1 + $0x1568] sm:$0xff]
    %v746 = vld [vmem:[%s1 + $0x1570] sm:$0xff]
    %v747 = vld [vmem:[%s1 + $0x1578] sm:$0xff]
    %v748 = vld [vmem:[%s1 + $0x1580] sm:$0xff]
    %v749 = vld [vmem:[%s1 + $0x1588] sm:$0xff]
    %v750 = vld [vmem:[%s1 + $0x1590] sm:$0xff]
    %v751 = vld [vmem:[%s1 + $0x1598] sm:$0xff]
    %v752 = vld [vmem:[%s1 + $0x15a0] sm:$0xff]
    %v753 = vld [vmem:[%s1 + $0x15a8] sm:$0xff]
    %v754 = vld [vmem:[%s1 + $0x15b0] sm:$0xff]
    %v755 = vld [vmem:[%s1 + $0x15b8] sm:$0xff]
    %v756 = vld [vmem:[%s1 + $0x15c0] sm:$0xff]
    %v757 = vld [vmem:[%s1 + $0x15c8] sm:$0xff]
    %v758 = vld [vmem:[%s1 + $0x15d0] sm:$0xff]
    %v759 = vld [vmem:[%s1 + $0x15d8] sm:$0xff]
    %v760 = vld [vmem:[%s1 + $0x15e0] sm:$0xff]
    %v761 = vld [vmem:[%s1 + $0x15e8] sm:$0xff]
    %v762 = vld [vmem:[%s1 + $0x15f0] sm:$0xff]
    %v763 = vld [vmem:[%s1 + $0x15f8] sm:$0x1]
    %vm764 = vcmask 990208
    %v766 = vsel %vm764, %v59, 0
    %vm768 = vcmask 1040384
    %v770 = vsel %vm768, %v763, 0
    %772 = vmatprep.subr.mxu0 0.0
    %773 = vmatpush1.msra.mxu0 %v75
    %774 = vmatprep.subr.mxu0 0.0
    %775 = vmatpush1.msra.mxu0 %v74
    %776 = vmatprep.subr.mxu0 0.0
    %777 = vmatpush1.msra.mxu0 %v73
    %778 = vmatprep.subr.mxu0 0.0
    %779 = vmatpush1.msra.mxu0 %v72
    %780 = vmatprep.subr.mxu0 0.0
    %781 = vmatpush1.msra.mxu0 %v71
    %782 = vmatprep.subr.mxu0 0.0
    %783 = vmatpush1.msra.mxu0 %v70
    %784 = vmatprep.subr.mxu0 0.0
    %785 = vmatpush1.msra.mxu0 %v69
    %786 = vmatprep.subr.mxu0 0.0
    %787 = vmatpush1.msra.mxu0 %v68
    %788 = vmatprep.subr.mxu0 0.0
    %789 = vmatpush1.msra.mxu0 %v67
    %790 = vmatprep.subr.mxu0 0.0
    %791 = vmatpush1.msra.mxu0 %v66
    %792 = vmatprep.subr.mxu0 0.0
    %793 = vmatpush1.msra.mxu0 %v65
    %794 = vmatprep.subr.mxu0 0.0
    %795 = vmatpush1.msra.mxu0 %v64
    %796 = vmatprep.subr.mxu0 0.0
    %797 = vmatpush1.msra.mxu0 %v63
    %798 = vmatprep.subr.mxu0 0.0
    %799 = vmatpush1.msra.mxu0 %v62
    %800 = vmatprep.subr.mxu0 0.0
    %801 = vmatpush1.msra.mxu0 %v61
    %802 = vmatprep.subr.mxu0 0.0
    %803 = vmatpush1.msra.mxu0 %v60
    %804 = vmatprep.subr.mxu0 0.0
    %805 = vmatpush2.msra.mxu0 %v91
    %806 = vmatprep.subr.mxu0 0.0
    %807 = vmatpush2.msra.mxu0 %v90
    %808 = vmatprep.subr.mxu0 0.0
    %809 = vmatpush2.msra.mxu0 %v89
    %810 = vmatprep.subr.mxu0 0.0
    %811 = vmatpush2.msra.mxu0 %v88
    %812 = vmatprep.subr.mxu0 0.0
    %813 = vmatpush2.msra.mxu0 %v87
    %814 = vmatprep.subr.mxu0 0.0
    %815 = vmatpush2.msra.mxu0 %v86
    %816 = vmatprep.subr.mxu0 0.0
    %817 = vmatpush2.msra.mxu0 %v85
    %818 = vmatprep.subr.mxu0 0.0
    %819 = vmatpush2.msra.mxu0 %v84
    %820 = vmatprep.subr.mxu0 0.0
    %821 = vmatpush2.msra.mxu0 %v83
    %822 = vmatprep.subr.mxu0 0.0
    %823 = vmatpush2.msra.mxu0 %v82
    %824 = vmatprep.subr.mxu0 0.0
    %825 = vmatpush2.msra.mxu0 %v81
    %826 = vmatprep.subr.mxu0 0.0
    %827 = vmatpush2.msra.mxu0 %v80
    %828 = vmatprep.subr.mxu0 0.0
    %829 = vmatpush2.msra.mxu0 %v79
    %830 = vmatprep.subr.mxu0 0.0
    %831 = vmatpush2.msra.mxu0 %v78
    %832 = vmatprep.subr.mxu0 0.0
    %833 = vmatpush2.msra.mxu0 %v77
    %834 = vmatprep.subr.mxu0 0.0
    %835 = vmatpush2.msra.mxu0 %v76
    %836 = vmatprep.mubr.f32.mxu0 %v17
    %837 = vmatmul.mubr.f32.gmra.mxu0 %v16
    %v838 = vpop.f32.mrf.mxu0
    %v839 = vadd.f32 0.0, %v838
    %v840 = vpop.f32.mrf.mxu0
    %841 = vdwg.mxu0
    %842 = vmatprep.subr.mxu0 0.0
    %843 = vmatpush1.msra.mxu0 %v107
    %844 = vmatprep.subr.mxu0 0.0
    %845 = vmatpush1.msra.mxu0 %v106
    %846 = vmatprep.subr.mxu0 0.0
    %847 = vmatpush1.msra.mxu0 %v105
    %848 = vmatprep.subr.mxu0 0.0
    %849 = vmatpush1.msra.mxu0 %v104
    %850 = vmatprep.subr.mxu0 0.0
    %851 = vmatpush1.msra.mxu0 %v103
    %852 = vmatprep.subr.mxu0 0.0
    %853 = vmatpush1.msra.mxu0 %v102
    %854 = vmatprep.subr.mxu0 0.0
    %855 = vmatpush1.msra.mxu0 %v101
    %856 = vmatprep.subr.mxu0 0.0
    %857 = vmatpush1.msra.mxu0 %v100
    %858 = vmatprep.subr.mxu0 0.0
    %859 = vmatpush1.msra.mxu0 %v99
    %860 = vmatprep.subr.mxu0 0.0
    %861 = vmatpush1.msra.mxu0 %v98
    %862 = vmatprep.subr.mxu0 0.0
    %863 = vmatpush1.msra.mxu0 %v97
    %864 = vmatprep.subr.mxu0 0.0
    %865 = vmatpush1.msra.mxu0 %v96
    %866 = vmatprep.subr.mxu0 0.0
    %867 = vmatpush1.msra.mxu0 %v95
    %868 = vmatprep.subr.mxu0 0.0
    %869 = vmatpush1.msra.mxu0 %v94
    %870 = vmatprep.subr.mxu0 0.0
    %871 = vmatpush1.msra.mxu0 %v93
    %872 = vmatprep.subr.mxu0 0.0
    %873 = vmatpush1.msra.mxu0 %v92
    %874 = vmatprep.subr.mxu0 0.0
    %875 = vmatpush2.msra.mxu0 %v123
    %876 = vmatprep.subr.mxu0 0.0
    %877 = vmatpush2.msra.mxu0 %v122
    %878 = vmatprep.subr.mxu0 0.0
    %879 = vmatpush2.msra.mxu0 %v121
    %880 = vmatprep.subr.mxu0 0.0
    %881 = vmatpush2.msra.mxu0 %v120
    %882 = vmatprep.subr.mxu0 0.0
    %883 = vmatpush2.msra.mxu0 %v119
    %884 = vmatprep.subr.mxu0 0.0
    %885 = vmatpush2.msra.mxu0 %v118
    %886 = vmatprep.subr.mxu0 0.0
    %887 = vmatpush2.msra.mxu0 %v117
    %888 = vmatprep.subr.mxu0 0.0
    %889 = vmatpush2.msra.mxu0 %v116
    %890 = vmatprep.subr.mxu0 0.0
    %891 = vmatpush2.msra.mxu0 %v115
    %892 = vmatprep.subr.mxu0 0.0
    %893 = vmatpush2.msra.mxu0 %v114
    %894 = vmatprep.subr.mxu0 0.0
    %895 = vmatpush2.msra.mxu0 %v113
    %896 = vmatprep.subr.mxu0 0.0
    %897 = vmatpush2.msra.mxu0 %v112
    %898 = vmatprep.subr.mxu0 0.0
    %899 = vmatpush2.msra.mxu0 %v111
    %900 = vmatprep.subr.mxu0 0.0
    %901 = vmatpush2.msra.mxu0 %v110
    %902 = vmatprep.subr.mxu0 0.0
    %903 = vmatpush2.msra.mxu0 %v109
    %904 = vmatprep.subr.mxu0 0.0
    %905 = vmatpush2.msra.mxu0 %v108
    %906 = vmatprep.mubr.f32.mxu0 %v19
    %907 = vmatmul.mubr.f32.gmra.mxu0 %v18
    %v908 = vpop.f32.mrf.mxu0
    %v909 = vadd.f32 %v839, %v908
    %v910 = vpop.f32.mrf.mxu0
    %911 = vdwg.mxu0
    %912 = vmatprep.subr.mxu0 0.0
    %913 = vmatpush1.msra.mxu0 %v139
    %914 = vmatprep.subr.mxu0 0.0
    %915 = vmatpush1.msra.mxu0 %v138
    %916 = vmatprep.subr.mxu0 0.0
    %917 = vmatpush1.msra.mxu0 %v137
    %918 = vmatprep.subr.mxu0 0.0
    %919 = vmatpush1.msra.mxu0 %v136
    %920 = vmatprep.subr.mxu0 0.0
    %921 = vmatpush1.msra.mxu0 %v135
    %922 = vmatprep.subr.mxu0 0.0
    %923 = vmatpush1.msra.mxu0 %v134
    %924 = vmatprep.subr.mxu0 0.0
    %925 = vmatpush1.msra.mxu0 %v133
    %926 = vmatprep.subr.mxu0 0.0
    %927 = vmatpush1.msra.mxu0 %v132
    %928 = vmatprep.subr.mxu0 0.0
    %929 = vmatpush1.msra.mxu0 %v131
    %930 = vmatprep.subr.mxu0 0.0
    %931 = vmatpush1.msra.mxu0 %v130
    %932 = vmatprep.subr.mxu0 0.0
    %933 = vmatpush1.msra.mxu0 %v129
    %934 = vmatprep.subr.mxu0 0.0
    %935 = vmatpush1.msra.mxu0 %v128
    %936 = vmatprep.subr.mxu0 0.0
    %937 = vmatpush1.msra.mxu0 %v127
    %938 = vmatprep.subr.mxu0 0.0
    %939 = vmatpush1.msra.mxu0 %v126
    %940 = vmatprep.subr.mxu0 0.0
    %941 = vmatpush1.msra.mxu0 %v125
    %942 = vmatprep.subr.mxu0 0.0
    %943 = vmatpush1.msra.mxu0 %v124
    %944 = vmatprep.subr.mxu0 0.0
    %945 = vmatpush2.msra.mxu0 %v155
    %946 = vmatprep.subr.mxu0 0.0
    %947 = vmatpush2.msra.mxu0 %v154
    %948 = vmatprep.subr.mxu0 0.0
    %949 = vmatpush2.msra.mxu0 %v153
    %950 = vmatprep.subr.mxu0 0.0
    %951 = vmatpush2.msra.mxu0 %v152
    %952 = vmatprep.subr.mxu0 0.0
    %953 = vmatpush2.msra.mxu0 %v151
    %954 = vmatprep.subr.mxu0 0.0
    %955 = vmatpush2.msra.mxu0 %v150
    %956 = vmatprep.subr.mxu0 0.0
    %957 = vmatpush2.msra.mxu0 %v149
    %958 = vmatprep.subr.mxu0 0.0
    %959 = vmatpush2.msra.mxu0 %v148
    %960 = vmatprep.subr.mxu0 0.0
    %961 = vmatpush2.msra.mxu0 %v147
    %962 = vmatprep.subr.mxu0 0.0
    %963 = vmatpush2.msra.mxu0 %v146
    %964 = vmatprep.subr.mxu0 0.0
    %965 = vmatpush2.msra.mxu0 %v145
    %966 = vmatprep.subr.mxu0 0.0
    %967 = vmatpush2.msra.mxu0 %v144
    %968 = vmatprep.subr.mxu0 0.0
    %969 = vmatpush2.msra.mxu0 %v143
    %970 = vmatprep.subr.mxu0 0.0
    %971 = vmatpush2.msra.mxu0 %v142
    %972 = vmatprep.subr.mxu0 0.0
    %973 = vmatpush2.msra.mxu0 %v141
    %974 = vmatprep.subr.mxu0 0.0
    %975 = vmatpush2.msra.mxu0 %v140
    %976 = vmatprep.mubr.f32.mxu0 %v21
    %977 = vmatmul.mubr.f32.gmra.mxu0 %v20
    %v978 = vpop.f32.mrf.mxu0
    %v979 = vadd.f32 %v909, %v978
    %v980 = vpop.f32.mrf.mxu0
    %981 = vdwg.mxu0
    %982 = vmatprep.subr.mxu0 0.0
    %983 = vmatpush1.msra.mxu0 %v171
    %984 = vmatprep.subr.mxu0 0.0
    %985 = vmatpush1.msra.mxu0 %v170
    %986 = vmatprep.subr.mxu0 0.0
    %987 = vmatpush1.msra.mxu0 %v169
    %988 = vmatprep.subr.mxu0 0.0
    %989 = vmatpush1.msra.mxu0 %v168
    %990 = vmatprep.subr.mxu0 0.0
    %991 = vmatpush1.msra.mxu0 %v167
    %992 = vmatprep.subr.mxu0 0.0
    %993 = vmatpush1.msra.mxu0 %v166
    %994 = vmatprep.subr.mxu0 0.0
    %995 = vmatpush1.msra.mxu0 %v165
    %996 = vmatprep.subr.mxu0 0.0
    %997 = vmatpush1.msra.mxu0 %v164
    %998 = vmatprep.subr.mxu0 0.0
    %999 = vmatpush1.msra.mxu0 %v163
    %1000 = vmatprep.subr.mxu0 0.0
    %1001 = vmatpush1.msra.mxu0 %v162
    %1002 = vmatprep.subr.mxu0 0.0
    %1003 = vmatpush1.msra.mxu0 %v161
    %1004 = vmatprep.subr.mxu0 0.0
    %1005 = vmatpush1.msra.mxu0 %v160
    %1006 = vmatprep.subr.mxu0 0.0
    %1007 = vmatpush1.msra.mxu0 %v159
    %1008 = vmatprep.subr.mxu0 0.0
    %1009 = vmatpush1.msra.mxu0 %v158
    %1010 = vmatprep.subr.mxu0 0.0
    %1011 = vmatpush1.msra.mxu0 %v157
    %1012 = vmatprep.subr.mxu0 0.0
    %1013 = vmatpush1.msra.mxu0 %v156
    %1014 = vmatprep.subr.mxu0 0.0
    %1015 = vmatpush2.msra.mxu0 %v187
    %1016 = vmatprep.subr.mxu0 0.0
    %1017 = vmatpush2.msra.mxu0 %v186
    %1018 = vmatprep.subr.mxu0 0.0
    %1019 = vmatpush2.msra.mxu0 %v185
    %1020 = vmatprep.subr.mxu0 0.0
    %1021 = vmatpush2.msra.mxu0 %v184
    %1022 = vmatprep.subr.mxu0 0.0
    %1023 = vmatpush2.msra.mxu0 %v183
    %1024 = vmatprep.subr.mxu0 0.0
    %1025 = vmatpush2.msra.mxu0 %v182
    %1026 = vmatprep.subr.mxu0 0.0
    %1027 = vmatpush2.msra.mxu0 %v181
    %1028 = vmatprep.subr.mxu0 0.0
    %1029 = vmatpush2.msra.mxu0 %v180
    %1030 = vmatprep.subr.mxu0 0.0
    %1031 = vmatpush2.msra.mxu0 %v179
    %1032 = vmatprep.subr.mxu0 0.0
    %1033 = vmatpush2.msra.mxu0 %v178
    %1034 = vmatprep.subr.mxu0 0.0
    %1035 = vmatpush2.msra.mxu0 %v177
    %1036 = vmatprep.subr.mxu0 0.0
    %1037 = vmatpush2.msra.mxu0 %v176
    %1038 = vmatprep.subr.mxu0 0.0
    %1039 = vmatpush2.msra.mxu0 %v175
    %1040 = vmatprep.subr.mxu0 0.0
    %1041 = vmatpush2.msra.mxu0 %v174
    %1042 = vmatprep.subr.mxu0 0.0
    %1043 = vmatpush2.msra.mxu0 %v173
    %1044 = vmatprep.subr.mxu0 0.0
    %1045 = vmatpush2.msra.mxu0 %v172
    %1046 = vmatprep.mubr.f32.mxu0 %v23
    %1047 = vmatmul.mubr.f32.gmra.mxu0 %v22
    %v1048 = vpop.f32.mrf.mxu0
    %v1049 = vadd.f32 %v979, %v1048
    %v1050 = vpop.f32.mrf.mxu0
    %1051 = vdwg.mxu0
    %1052 = vmatprep.subr.mxu0 0.0
    %1053 = vmatpush1.msra.mxu0 %v203
    %1054 = vmatprep.subr.mxu0 0.0
    %1055 = vmatpush1.msra.mxu0 %v202
    %1056 = vmatprep.subr.mxu0 0.0
    %1057 = vmatpush1.msra.mxu0 %v201
    %1058 = vmatprep.subr.mxu0 0.0
    %1059 = vmatpush1.msra.mxu0 %v200
    %1060 = vmatprep.subr.mxu0 0.0
    %1061 = vmatpush1.msra.mxu0 %v199
    %1062 = vmatprep.subr.mxu0 0.0
    %1063 = vmatpush1.msra.mxu0 %v198
    %1064 = vmatprep.subr.mxu0 0.0
    %1065 = vmatpush1.msra.mxu0 %v197
    %1066 = vmatprep.subr.mxu0 0.0
    %1067 = vmatpush1.msra.mxu0 %v196
    %1068 = vmatprep.subr.mxu0 0.0
    %1069 = vmatpush1.msra.mxu0 %v195
    %1070 = vmatprep.subr.mxu0 0.0
    %1071 = vmatpush1.msra.mxu0 %v194
    %1072 = vmatprep.subr.mxu0 0.0
    %1073 = vmatpush1.msra.mxu0 %v193
    %1074 = vmatprep.subr.mxu0 0.0
    %1075 = vmatpush1.msra.mxu0 %v192
    %1076 = vmatprep.subr.mxu0 0.0
    %1077 = vmatpush1.msra.mxu0 %v191
    %1078 = vmatprep.subr.mxu0 0.0
    %1079 = vmatpush1.msra.mxu0 %v190
    %1080 = vmatprep.subr.mxu0 0.0
    %1081 = vmatpush1.msra.mxu0 %v189
    %1082 = vmatprep.subr.mxu0 0.0
    %1083 = vmatpush1.msra.mxu0 %v188
    %1084 = vmatprep.subr.mxu0 0.0
    %1085 = vmatpush2.msra.mxu0 %v219
    %1086 = vmatprep.subr.mxu0 0.0
    %1087 = vmatpush2.msra.mxu0 %v218
    %1088 = vmatprep.subr.mxu0 0.0
    %1089 = vmatpush2.msra.mxu0 %v217
    %1090 = vmatprep.subr.mxu0 0.0
    %1091 = vmatpush2.msra.mxu0 %v216
    %1092 = vmatprep.subr.mxu0 0.0
    %1093 = vmatpush2.msra.mxu0 %v215
    %1094 = vmatprep.subr.mxu0 0.0
    %1095 = vmatpush2.msra.mxu0 %v214
    %1096 = vmatprep.subr.mxu0 0.0
    %1097 = vmatpush2.msra.mxu0 %v213
    %1098 = vmatprep.subr.mxu0 0.0
    %1099 = vmatpush2.msra.mxu0 %v212
    %1100 = vmatprep.subr.mxu0 0.0
    %1101 = vmatpush2.msra.mxu0 %v211
    %1102 = vmatprep.subr.mxu0 0.0
    %1103 = vmatpush2.msra.mxu0 %v210
    %1104 = vmatprep.subr.mxu0 0.0
    %1105 = vmatpush2.msra.mxu0 %v209
    %1106 = vmatprep.subr.mxu0 0.0
    %1107 = vmatpush2.msra.mxu0 %v208
    %1108 = vmatprep.subr.mxu0 0.0
    %1109 = vmatpush2.msra.mxu0 %v207
    %1110 = vmatprep.subr.mxu0 0.0
    %1111 = vmatpush2.msra.mxu0 %v206
    %1112 = vmatprep.subr.mxu0 0.0
    %1113 = vmatpush2.msra.mxu0 %v205
    %1114 = vmatprep.subr.mxu0 0.0
    %1115 = vmatpush2.msra.mxu0 %v204
    %1116 = vmatprep.mubr.f32.mxu0 %v25
    %1117 = vmatmul.mubr.f32.gmra.mxu0 %v24
    %v1118 = vpop.f32.mrf.mxu0
    %v1119 = vadd.f32 %v1049, %v1118
    %v1120 = vpop.f32.mrf.mxu0
    %1121 = vdwg.mxu0
    %1122 = vmatprep.subr.mxu0 0.0
    %1123 = vmatpush1.msra.mxu0 %v235
    %1124 = vmatprep.subr.mxu0 0.0
    %1125 = vmatpush1.msra.mxu0 %v234
    %1126 = vmatprep.subr.mxu0 0.0
    %1127 = vmatpush1.msra.mxu0 %v233
    %1128 = vmatprep.subr.mxu0 0.0
    %1129 = vmatpush1.msra.mxu0 %v232
    %1130 = vmatprep.subr.mxu0 0.0
    %1131 = vmatpush1.msra.mxu0 %v231
    %1132 = vmatprep.subr.mxu0 0.0
    %1133 = vmatpush1.msra.mxu0 %v230
    %1134 = vmatprep.subr.mxu0 0.0
    %1135 = vmatpush1.msra.mxu0 %v229
    %1136 = vmatprep.subr.mxu0 0.0
    %1137 = vmatpush1.msra.mxu0 %v228
    %1138 = vmatprep.subr.mxu0 0.0
    %1139 = vmatpush1.msra.mxu0 %v227
    %1140 = vmatprep.subr.mxu0 0.0
    %1141 = vmatpush1.msra.mxu0 %v226
    %1142 = vmatprep.subr.mxu0 0.0
    %1143 = vmatpush1.msra.mxu0 %v225
    %1144 = vmatprep.subr.mxu0 0.0
    %1145 = vmatpush1.msra.mxu0 %v224
    %1146 = vmatprep.subr.mxu0 0.0
    %1147 = vmatpush1.msra.mxu0 %v223
    %1148 = vmatprep.subr.mxu0 0.0
    %1149 = vmatpush1.msra.mxu0 %v222
    %1150 = vmatprep.subr.mxu0 0.0
    %1151 = vmatpush1.msra.mxu0 %v221
    %1152 = vmatprep.subr.mxu0 0.0
    %1153 = vmatpush1.msra.mxu0 %v220
    %1154 = vmatprep.subr.mxu0 0.0
    %1155 = vmatpush2.msra.mxu0 %v251
    %1156 = vmatprep.subr.mxu0 0.0
    %1157 = vmatpush2.msra.mxu0 %v250
    %1158 = vmatprep.subr.mxu0 0.0
    %1159 = vmatpush2.msra.mxu0 %v249
    %1160 = vmatprep.subr.mxu0 0.0
    %1161 = vmatpush2.msra.mxu0 %v248
    %1162 = vmatprep.subr.mxu0 0.0
    %1163 = vmatpush2.msra.mxu0 %v247
    %1164 = vmatprep.subr.mxu0 0.0
    %1165 = vmatpush2.msra.mxu0 %v246
    %1166 = vmatprep.subr.mxu0 0.0
    %1167 = vmatpush2.msra.mxu0 %v245
    %1168 = vmatprep.subr.mxu0 0.0
    %1169 = vmatpush2.msra.mxu0 %v244
    %1170 = vmatprep.subr.mxu0 0.0
    %1171 = vmatpush2.msra.mxu0 %v243
    %1172 = vmatprep.subr.mxu0 0.0
    %1173 = vmatpush2.msra.mxu0 %v242
    %1174 = vmatprep.subr.mxu0 0.0
    %1175 = vmatpush2.msra.mxu0 %v241
    %1176 = vmatprep.subr.mxu0 0.0
    %1177 = vmatpush2.msra.mxu0 %v240
    %1178 = vmatprep.subr.mxu0 0.0
    %1179 = vmatpush2.msra.mxu0 %v239
    %1180 = vmatprep.subr.mxu0 0.0
    %1181 = vmatpush2.msra.mxu0 %v238
    %1182 = vmatprep.subr.mxu0 0.0
    %1183 = vmatpush2.msra.mxu0 %v237
    %1184 = vmatprep.subr.mxu0 0.0
    %1185 = vmatpush2.msra.mxu0 %v236
    %1186 = vmatprep.mubr.f32.mxu0 %v27
    %1187 = vmatmul.mubr.f32.gmra.mxu0 %v26
    %v1188 = vpop.f32.mrf.mxu0
    %v1189 = vadd.f32 %v1119, %v1188
    %v1190 = vpop.f32.mrf.mxu0
    %1191 = vdwg.mxu0
    %1192 = vmatprep.subr.mxu0 0.0
    %1193 = vmatpush1.msra.mxu0 %v267
    %1194 = vmatprep.subr.mxu0 0.0
    %1195 = vmatpush1.msra.mxu0 %v266
    %1196 = vmatprep.subr.mxu0 0.0
    %1197 = vmatpush1.msra.mxu0 %v265
    %1198 = vmatprep.subr.mxu0 0.0
    %1199 = vmatpush1.msra.mxu0 %v264
    %1200 = vmatprep.subr.mxu0 0.0
    %1201 = vmatpush1.msra.mxu0 %v263
    %1202 = vmatprep.subr.mxu0 0.0
    %1203 = vmatpush1.msra.mxu0 %v262
    %1204 = vmatprep.subr.mxu0 0.0
    %1205 = vmatpush1.msra.mxu0 %v261
    %1206 = vmatprep.subr.mxu0 0.0
    %1207 = vmatpush1.msra.mxu0 %v260
    %1208 = vmatprep.subr.mxu0 0.0
    %1209 = vmatpush1.msra.mxu0 %v259
    %1210 = vmatprep.subr.mxu0 0.0
    %1211 = vmatpush1.msra.mxu0 %v258
    %1212 = vmatprep.subr.mxu0 0.0
    %1213 = vmatpush1.msra.mxu0 %v257
    %1214 = vmatprep.subr.mxu0 0.0
    %1215 = vmatpush1.msra.mxu0 %v256
    %1216 = vmatprep.subr.mxu0 0.0
    %1217 = vmatpush1.msra.mxu0 %v255
    %1218 = vmatprep.subr.mxu0 0.0
    %1219 = vmatpush1.msra.mxu0 %v254
    %1220 = vmatprep.subr.mxu0 0.0
    %1221 = vmatpush1.msra.mxu0 %v253
    %1222 = vmatprep.subr.mxu0 0.0
    %1223 = vmatpush1.msra.mxu0 %v252
    %1224 = vmatprep.subr.mxu0 0.0
    %1225 = vmatpush2.msra.mxu0 %v283
    %1226 = vmatprep.subr.mxu0 0.0
    %1227 = vmatpush2.msra.mxu0 %v282
    %1228 = vmatprep.subr.mxu0 0.0
    %1229 = vmatpush2.msra.mxu0 %v281
    %1230 = vmatprep.subr.mxu0 0.0
    %1231 = vmatpush2.msra.mxu0 %v280
    %1232 = vmatprep.subr.mxu0 0.0
    %1233 = vmatpush2.msra.mxu0 %v279
    %1234 = vmatprep.subr.mxu0 0.0
    %1235 = vmatpush2.msra.mxu0 %v278
    %1236 = vmatprep.subr.mxu0 0.0
    %1237 = vmatpush2.msra.mxu0 %v277
    %1238 = vmatprep.subr.mxu0 0.0
    %1239 = vmatpush2.msra.mxu0 %v276
    %1240 = vmatprep.subr.mxu0 0.0
    %1241 = vmatpush2.msra.mxu0 %v275
    %1242 = vmatprep.subr.mxu0 0.0
    %1243 = vmatpush2.msra.mxu0 %v274
    %1244 = vmatprep.subr.mxu0 0.0
    %1245 = vmatpush2.msra.mxu0 %v273
    %1246 = vmatprep.subr.mxu0 0.0
    %1247 = vmatpush2.msra.mxu0 %v272
    %1248 = vmatprep.subr.mxu0 0.0
    %1249 = vmatpush2.msra.mxu0 %v271
    %1250 = vmatprep.subr.mxu0 0.0
    %1251 = vmatpush2.msra.mxu0 %v270
    %1252 = vmatprep.subr.mxu0 0.0
    %1253 = vmatpush2.msra.mxu0 %v269
    %1254 = vmatprep.subr.mxu0 0.0
    %1255 = vmatpush2.msra.mxu0 %v268
    %1256 = vmatprep.mubr.f32.mxu0 %v29
    %1257 = vmatmul.mubr.f32.gmra.mxu0 %v28
    %v1258 = vpop.f32.mrf.mxu0
    %v1259 = vadd.f32 %v1189, %v1258
    %v1260 = vpop.f32.mrf.mxu0
    %1261 = vdwg.mxu0
    %1262 = vmatprep.subr.mxu0 0.0
    %1263 = vmatpush1.msra.mxu0 %v299
    %1264 = vmatprep.subr.mxu0 0.0
    %1265 = vmatpush1.msra.mxu0 %v298
    %1266 = vmatprep.subr.mxu0 0.0
    %1267 = vmatpush1.msra.mxu0 %v297
    %1268 = vmatprep.subr.mxu0 0.0
    %1269 = vmatpush1.msra.mxu0 %v296
    %1270 = vmatprep.subr.mxu0 0.0
    %1271 = vmatpush1.msra.mxu0 %v295
    %1272 = vmatprep.subr.mxu0 0.0
    %1273 = vmatpush1.msra.mxu0 %v294
    %1274 = vmatprep.subr.mxu0 0.0
    %1275 = vmatpush1.msra.mxu0 %v293
    %1276 = vmatprep.subr.mxu0 0.0
    %1277 = vmatpush1.msra.mxu0 %v292
    %1278 = vmatprep.subr.mxu0 0.0
    %1279 = vmatpush1.msra.mxu0 %v291
    %1280 = vmatprep.subr.mxu0 0.0
    %1281 = vmatpush1.msra.mxu0 %v290
    %1282 = vmatprep.subr.mxu0 0.0
    %1283 = vmatpush1.msra.mxu0 %v289
    %1284 = vmatprep.subr.mxu0 0.0
    %1285 = vmatpush1.msra.mxu0 %v288
    %1286 = vmatprep.subr.mxu0 0.0
    %1287 = vmatpush1.msra.mxu0 %v287
    %1288 = vmatprep.subr.mxu0 0.0
    %1289 = vmatpush1.msra.mxu0 %v286
    %1290 = vmatprep.subr.mxu0 0.0
    %1291 = vmatpush1.msra.mxu0 %v285
    %1292 = vmatprep.subr.mxu0 0.0
    %1293 = vmatpush1.msra.mxu0 %v284
    %1294 = vmatprep.subr.mxu0 0.0
    %1295 = vmatpush2.msra.mxu0 %v315
    %1296 = vmatprep.subr.mxu0 0.0
    %1297 = vmatpush2.msra.mxu0 %v314
    %1298 = vmatprep.subr.mxu0 0.0
    %1299 = vmatpush2.msra.mxu0 %v313
    %1300 = vmatprep.subr.mxu0 0.0
    %1301 = vmatpush2.msra.mxu0 %v312
    %1302 = vmatprep.subr.mxu0 0.0
    %1303 = vmatpush2.msra.mxu0 %v311
    %1304 = vmatprep.subr.mxu0 0.0
    %1305 = vmatpush2.msra.mxu0 %v310
    %1306 = vmatprep.subr.mxu0 0.0
    %1307 = vmatpush2.msra.mxu0 %v309
    %1308 = vmatprep.subr.mxu0 0.0
    %1309 = vmatpush2.msra.mxu0 %v308
    %1310 = vmatprep.subr.mxu0 0.0
    %1311 = vmatpush2.msra.mxu0 %v307
    %1312 = vmatprep.subr.mxu0 0.0
    %1313 = vmatpush2.msra.mxu0 %v306
    %1314 = vmatprep.subr.mxu0 0.0
    %1315 = vmatpush2.msra.mxu0 %v305
    %1316 = vmatprep.subr.mxu0 0.0
    %1317 = vmatpush2.msra.mxu0 %v304
    %1318 = vmatprep.subr.mxu0 0.0
    %1319 = vmatpush2.msra.mxu0 %v303
    %1320 = vmatprep.subr.mxu0 0.0
    %1321 = vmatpush2.msra.mxu0 %v302
    %1322 = vmatprep.subr.mxu0 0.0
    %1323 = vmatpush2.msra.mxu0 %v301
    %1324 = vmatprep.subr.mxu0 0.0
    %1325 = vmatpush2.msra.mxu0 %v300
    %1326 = vmatprep.mubr.f32.mxu0 %v31
    %1327 = vmatmul.mubr.f32.gmra.mxu0 %v30
    %v1328 = vpop.f32.mrf.mxu0
    %v1329 = vadd.f32 %v1259, %v1328
    %v1330 = vpop.f32.mrf.mxu0
    %1331 = vdwg.mxu0
    %1332 = vmatprep.subr.mxu0 0.0
    %1333 = vmatpush1.msra.mxu0 %v331
    %1334 = vmatprep.subr.mxu0 0.0
    %1335 = vmatpush1.msra.mxu0 %v330
    %1336 = vmatprep.subr.mxu0 0.0
    %1337 = vmatpush1.msra.mxu0 %v329
    %1338 = vmatprep.subr.mxu0 0.0
    %1339 = vmatpush1.msra.mxu0 %v328
    %1340 = vmatprep.subr.mxu0 0.0
    %1341 = vmatpush1.msra.mxu0 %v327
    %1342 = vmatprep.subr.mxu0 0.0
    %1343 = vmatpush1.msra.mxu0 %v326
    %1344 = vmatprep.subr.mxu0 0.0
    %1345 = vmatpush1.msra.mxu0 %v325
    %1346 = vmatprep.subr.mxu0 0.0
    %1347 = vmatpush1.msra.mxu0 %v324
    %1348 = vmatprep.subr.mxu0 0.0
    %1349 = vmatpush1.msra.mxu0 %v323
    %1350 = vmatprep.subr.mxu0 0.0
    %1351 = vmatpush1.msra.mxu0 %v322
    %1352 = vmatprep.subr.mxu0 0.0
    %1353 = vmatpush1.msra.mxu0 %v321
    %1354 = vmatprep.subr.mxu0 0.0
    %1355 = vmatpush1.msra.mxu0 %v320
    %1356 = vmatprep.subr.mxu0 0.0
    %1357 = vmatpush1.msra.mxu0 %v319
    %1358 = vmatprep.subr.mxu0 0.0
    %1359 = vmatpush1.msra.mxu0 %v318
    %1360 = vmatprep.subr.mxu0 0.0
    %1361 = vmatpush1.msra.mxu0 %v317
    %1362 = vmatprep.subr.mxu0 0.0
    %1363 = vmatpush1.msra.mxu0 %v316
    %1364 = vmatprep.subr.mxu0 0.0
    %1365 = vmatpush2.msra.mxu0 %v347
    %1366 = vmatprep.subr.mxu0 0.0
    %1367 = vmatpush2.msra.mxu0 %v346
    %1368 = vmatprep.subr.mxu0 0.0
    %1369 = vmatpush2.msra.mxu0 %v345
    %1370 = vmatprep.subr.mxu0 0.0
    %1371 = vmatpush2.msra.mxu0 %v344
    %1372 = vmatprep.subr.mxu0 0.0
    %1373 = vmatpush2.msra.mxu0 %v343
    %1374 = vmatprep.subr.mxu0 0.0
    %1375 = vmatpush2.msra.mxu0 %v342
    %1376 = vmatprep.subr.mxu0 0.0
    %1377 = vmatpush2.msra.mxu0 %v341
    %1378 = vmatprep.subr.mxu0 0.0
    %1379 = vmatpush2.msra.mxu0 %v340
    %1380 = vmatprep.subr.mxu0 0.0
    %1381 = vmatpush2.msra.mxu0 %v339
    %1382 = vmatprep.subr.mxu0 0.0
    %1383 = vmatpush2.msra.mxu0 %v338
    %1384 = vmatprep.subr.mxu0 0.0
    %1385 = vmatpush2.msra.mxu0 %v337
    %1386 = vmatprep.subr.mxu0 0.0
    %1387 = vmatpush2.msra.mxu0 %v336
    %1388 = vmatprep.subr.mxu0 0.0
    %1389 = vmatpush2.msra.mxu0 %v335
    %1390 = vmatprep.subr.mxu0 0.0
    %1391 = vmatpush2.msra.mxu0 %v334
    %1392 = vmatprep.subr.mxu0 0.0
    %1393 = vmatpush2.msra.mxu0 %v333
    %1394 = vmatprep.subr.mxu0 0.0
    %1395 = vmatpush2.msra.mxu0 %v332
    %1396 = vmatprep.mubr.f32.mxu0 %v33
    %1397 = vmatmul.mubr.f32.gmra.mxu0 %v32
    %v1398 = vpop.f32.mrf.mxu0
    %v1399 = vadd.f32 %v1329, %v1398
    %v1400 = vpop.f32.mrf.mxu0
    %1401 = vdwg.mxu0
    %1402 = vmatprep.subr.mxu0 0.0
    %1403 = vmatpush1.msra.mxu0 %v363
    %1404 = vmatprep.subr.mxu0 0.0
    %1405 = vmatpush1.msra.mxu0 %v362
    %1406 = vmatprep.subr.mxu0 0.0
    %1407 = vmatpush1.msra.mxu0 %v361
    %1408 = vmatprep.subr.mxu0 0.0
    %1409 = vmatpush1.msra.mxu0 %v360
    %1410 = vmatprep.subr.mxu0 0.0
    %1411 = vmatpush1.msra.mxu0 %v359
    %1412 = vmatprep.subr.mxu0 0.0
    %1413 = vmatpush1.msra.mxu0 %v358
    %1414 = vmatprep.subr.mxu0 0.0
    %1415 = vmatpush1.msra.mxu0 %v357
    %1416 = vmatprep.subr.mxu0 0.0
    %1417 = vmatpush1.msra.mxu0 %v356
    %1418 = vmatprep.subr.mxu0 0.0
    %1419 = vmatpush1.msra.mxu0 %v355
    %1420 = vmatprep.subr.mxu0 0.0
    %1421 = vmatpush1.msra.mxu0 %v354
    %1422 = vmatprep.subr.mxu0 0.0
    %1423 = vmatpush1.msra.mxu0 %v353
    %1424 = vmatprep.subr.mxu0 0.0
    %1425 = vmatpush1.msra.mxu0 %v352
    %1426 = vmatprep.subr.mxu0 0.0
    %1427 = vmatpush1.msra.mxu0 %v351
    %1428 = vmatprep.subr.mxu0 0.0
    %1429 = vmatpush1.msra.mxu0 %v350
    %1430 = vmatprep.subr.mxu0 0.0
    %1431 = vmatpush1.msra.mxu0 %v349
    %1432 = vmatprep.subr.mxu0 0.0
    %1433 = vmatpush1.msra.mxu0 %v348
    %1434 = vmatprep.subr.mxu0 0.0
    %1435 = vmatpush2.msra.mxu0 %v379
    %1436 = vmatprep.subr.mxu0 0.0
    %1437 = vmatpush2.msra.mxu0 %v378
    %1438 = vmatprep.subr.mxu0 0.0
    %1439 = vmatpush2.msra.mxu0 %v377
    %1440 = vmatprep.subr.mxu0 0.0
    %1441 = vmatpush2.msra.mxu0 %v376
    %1442 = vmatprep.subr.mxu0 0.0
    %1443 = vmatpush2.msra.mxu0 %v375
    %1444 = vmatprep.subr.mxu0 0.0
    %1445 = vmatpush2.msra.mxu0 %v374
    %1446 = vmatprep.subr.mxu0 0.0
    %1447 = vmatpush2.msra.mxu0 %v373
    %1448 = vmatprep.subr.mxu0 0.0
    %1449 = vmatpush2.msra.mxu0 %v372
    %1450 = vmatprep.subr.mxu0 0.0
    %1451 = vmatpush2.msra.mxu0 %v371
    %1452 = vmatprep.subr.mxu0 0.0
    %1453 = vmatpush2.msra.mxu0 %v370
    %1454 = vmatprep.subr.mxu0 0.0
    %1455 = vmatpush2.msra.mxu0 %v369
    %1456 = vmatprep.subr.mxu0 0.0
    %1457 = vmatpush2.msra.mxu0 %v368
    %1458 = vmatprep.subr.mxu0 0.0
    %1459 = vmatpush2.msra.mxu0 %v367
    %1460 = vmatprep.subr.mxu0 0.0
    %1461 = vmatpush2.msra.mxu0 %v366
    %1462 = vmatprep.subr.mxu0 0.0
    %1463 = vmatpush2.msra.mxu0 %v365
    %1464 = vmatprep.subr.mxu0 0.0
    %1465 = vmatpush2.msra.mxu0 %v364
    %1466 = vmatprep.mubr.f32.mxu0 %v35
    %1467 = vmatmul.mubr.f32.gmra.mxu0 %v34
    %v1468 = vpop.f32.mrf.mxu0
    %v1469 = vadd.f32 %v1399, %v1468
    %v1470 = vpop.f32.mrf.mxu0
    %1471 = vdwg.mxu0
    %1472 = vmatprep.subr.mxu0 0.0
    %1473 = vmatpush1.msra.mxu0 %v395
    %1474 = vmatprep.subr.mxu0 0.0
    %1475 = vmatpush1.msra.mxu0 %v394
    %1476 = vmatprep.subr.mxu0 0.0
    %1477 = vmatpush1.msra.mxu0 %v393
    %1478 = vmatprep.subr.mxu0 0.0
    %1479 = vmatpush1.msra.mxu0 %v392
    %1480 = vmatprep.subr.mxu0 0.0
    %1481 = vmatpush1.msra.mxu0 %v391
    %1482 = vmatprep.subr.mxu0 0.0
    %1483 = vmatpush1.msra.mxu0 %v390
    %1484 = vmatprep.subr.mxu0 0.0
    %1485 = vmatpush1.msra.mxu0 %v389
    %1486 = vmatprep.subr.mxu0 0.0
    %1487 = vmatpush1.msra.mxu0 %v388
    %1488 = vmatprep.subr.mxu0 0.0
    %1489 = vmatpush1.msra.mxu0 %v387
    %1490 = vmatprep.subr.mxu0 0.0
    %1491 = vmatpush1.msra.mxu0 %v386
    %1492 = vmatprep.subr.mxu0 0.0
    %1493 = vmatpush1.msra.mxu0 %v385
    %1494 = vmatprep.subr.mxu0 0.0
    %1495 = vmatpush1.msra.mxu0 %v384
    %1496 = vmatprep.subr.mxu0 0.0
    %1497 = vmatpush1.msra.mxu0 %v383
    %1498 = vmatprep.subr.mxu0 0.0
    %1499 = vmatpush1.msra.mxu0 %v382
    %1500 = vmatprep.subr.mxu0 0.0
    %1501 = vmatpush1.msra.mxu0 %v381
    %1502 = vmatprep.subr.mxu0 0.0
    %1503 = vmatpush1.msra.mxu0 %v380
    %1504 = vmatprep.subr.mxu0 0.0
    %1505 = vmatpush2.msra.mxu0 %v411
    %1506 = vmatprep.subr.mxu0 0.0
    %1507 = vmatpush2.msra.mxu0 %v410
    %1508 = vmatprep.subr.mxu0 0.0
    %1509 = vmatpush2.msra.mxu0 %v409
    %1510 = vmatprep.subr.mxu0 0.0
    %1511 = vmatpush2.msra.mxu0 %v408
    %1512 = vmatprep.subr.mxu0 0.0
    %1513 = vmatpush2.msra.mxu0 %v407
    %1514 = vmatprep.subr.mxu0 0.0
    %1515 = vmatpush2.msra.mxu0 %v406
    %1516 = vmatprep.subr.mxu0 0.0
    %1517 = vmatpush2.msra.mxu0 %v405
    %1518 = vmatprep.subr.mxu0 0.0
    %1519 = vmatpush2.msra.mxu0 %v404
    %1520 = vmatprep.subr.mxu0 0.0
    %1521 = vmatpush2.msra.mxu0 %v403
    %1522 = vmatprep.subr.mxu0 0.0
    %1523 = vmatpush2.msra.mxu0 %v402
    %1524 = vmatprep.subr.mxu0 0.0
    %1525 = vmatpush2.msra.mxu0 %v401
    %1526 = vmatprep.subr.mxu0 0.0
    %1527 = vmatpush2.msra.mxu0 %v400
    %1528 = vmatprep.subr.mxu0 0.0
    %1529 = vmatpush2.msra.mxu0 %v399
    %1530 = vmatprep.subr.mxu0 0.0
    %1531 = vmatpush2.msra.mxu0 %v398
    %1532 = vmatprep.subr.mxu0 0.0
    %1533 = vmatpush2.msra.mxu0 %v397
    %1534 = vmatprep.subr.mxu0 0.0
    %1535 = vmatpush2.msra.mxu0 %v396
    %1536 = vmatprep.mubr.f32.mxu0 %v37
    %1537 = vmatmul.mubr.f32.gmra.mxu0 %v36
    %v1538 = vpop.f32.mrf.mxu0
    %v1539 = vadd.f32 %v1469, %v1538
    %v1540 = vpop.f32.mrf.mxu0
    %1541 = vdwg.mxu0
    %1542 = vmatprep.subr.mxu0 0.0
    %1543 = vmatpush1.msra.mxu0 %v427
    %1544 = vmatprep.subr.mxu0 0.0
    %1545 = vmatpush1.msra.mxu0 %v426
    %1546 = vmatprep.subr.mxu0 0.0
    %1547 = vmatpush1.msra.mxu0 %v425
    %1548 = vmatprep.subr.mxu0 0.0
    %1549 = vmatpush1.msra.mxu0 %v424
    %1550 = vmatprep.subr.mxu0 0.0
    %1551 = vmatpush1.msra.mxu0 %v423
    %1552 = vmatprep.subr.mxu0 0.0
    %1553 = vmatpush1.msra.mxu0 %v422
    %1554 = vmatprep.subr.mxu0 0.0
    %1555 = vmatpush1.msra.mxu0 %v421
    %1556 = vmatprep.subr.mxu0 0.0
    %1557 = vmatpush1.msra.mxu0 %v420
    %1558 = vmatprep.subr.mxu0 0.0
    %1559 = vmatpush1.msra.mxu0 %v419
    %1560 = vmatprep.subr.mxu0 0.0
    %1561 = vmatpush1.msra.mxu0 %v418
    %1562 = vmatprep.subr.mxu0 0.0
    %1563 = vmatpush1.msra.mxu0 %v417
    %1564 = vmatprep.subr.mxu0 0.0
    %1565 = vmatpush1.msra.mxu0 %v416
    %1566 = vmatprep.subr.mxu0 0.0
    %1567 = vmatpush1.msra.mxu0 %v415
    %1568 = vmatprep.subr.mxu0 0.0
    %1569 = vmatpush1.msra.mxu0 %v414
    %1570 = vmatprep.subr.mxu0 0.0
    %1571 = vmatpush1.msra.mxu0 %v413
    %1572 = vmatprep.subr.mxu0 0.0
    %1573 = vmatpush1.msra.mxu0 %v412
    %1574 = vmatprep.subr.mxu0 0.0
    %1575 = vmatpush2.msra.mxu0 %v443
    %1576 = vmatprep.subr.mxu0 0.0
    %1577 = vmatpush2.msra.mxu0 %v442
    %1578 = vmatprep.subr.mxu0 0.0
    %1579 = vmatpush2.msra.mxu0 %v441
    %1580 = vmatprep.subr.mxu0 0.0
    %1581 = vmatpush2.msra.mxu0 %v440
    %1582 = vmatprep.subr.mxu0 0.0
    %1583 = vmatpush2.msra.mxu0 %v439
    %1584 = vmatprep.subr.mxu0 0.0
    %1585 = vmatpush2.msra.mxu0 %v438
    %1586 = vmatprep.subr.mxu0 0.0
    %1587 = vmatpush2.msra.mxu0 %v437
    %1588 = vmatprep.subr.mxu0 0.0
    %1589 = vmatpush2.msra.mxu0 %v436
    %1590 = vmatprep.subr.mxu0 0.0
    %1591 = vmatpush2.msra.mxu0 %v435
    %1592 = vmatprep.subr.mxu0 0.0
    %1593 = vmatpush2.msra.mxu0 %v434
    %1594 = vmatprep.subr.mxu0 0.0
    %1595 = vmatpush2.msra.mxu0 %v433
    %1596 = vmatprep.subr.mxu0 0.0
    %1597 = vmatpush2.msra.mxu0 %v432
    %1598 = vmatprep.subr.mxu0 0.0
    %1599 = vmatpush2.msra.mxu0 %v431
    %1600 = vmatprep.subr.mxu0 0.0
    %1601 = vmatpush2.msra.mxu0 %v430
    %1602 = vmatprep.subr.mxu0 0.0
    %1603 = vmatpush2.msra.mxu0 %v429
    %1604 = vmatprep.subr.mxu0 0.0
    %1605 = vmatpush2.msra.mxu0 %v428
    %1606 = vmatprep.mubr.f32.mxu0 %v39
    %1607 = vmatmul.mubr.f32.gmra.mxu0 %v38
    %v1608 = vpop.f32.mrf.mxu0
    %v1609 = vadd.f32 %v1539, %v1608
    %v1610 = vpop.f32.mrf.mxu0
    %1611 = vdwg.mxu0
    %1612 = vmatprep.subr.mxu0 0.0
    %1613 = vmatpush1.msra.mxu0 %v459
    %1614 = vmatprep.subr.mxu0 0.0
    %1615 = vmatpush1.msra.mxu0 %v458
    %1616 = vmatprep.subr.mxu0 0.0
    %1617 = vmatpush1.msra.mxu0 %v457
    %1618 = vmatprep.subr.mxu0 0.0
    %1619 = vmatpush1.msra.mxu0 %v456
    %1620 = vmatprep.subr.mxu0 0.0
    %1621 = vmatpush1.msra.mxu0 %v455
    %1622 = vmatprep.subr.mxu0 0.0
    %1623 = vmatpush1.msra.mxu0 %v454
    %1624 = vmatprep.subr.mxu0 0.0
    %1625 = vmatpush1.msra.mxu0 %v453
    %1626 = vmatprep.subr.mxu0 0.0
    %1627 = vmatpush1.msra.mxu0 %v452
    %1628 = vmatprep.subr.mxu0 0.0
    %1629 = vmatpush1.msra.mxu0 %v451
    %1630 = vmatprep.subr.mxu0 0.0
    %1631 = vmatpush1.msra.mxu0 %v450
    %1632 = vmatprep.subr.mxu0 0.0
    %1633 = vmatpush1.msra.mxu0 %v449
    %1634 = vmatprep.subr.mxu0 0.0
    %1635 = vmatpush1.msra.mxu0 %v448
    %1636 = vmatprep.subr.mxu0 0.0
    %1637 = vmatpush1.msra.mxu0 %v447
    %1638 = vmatprep.subr.mxu0 0.0
    %1639 = vmatpush1.msra.mxu0 %v446
    %1640 = vmatprep.subr.mxu0 0.0
    %1641 = vmatpush1.msra.mxu0 %v445
    %1642 = vmatprep.subr.mxu0 0.0
    %1643 = vmatpush1.msra.mxu0 %v444
    %1644 = vmatprep.subr.mxu0 0.0
    %1645 = vmatpush2.msra.mxu0 %v475
    %1646 = vmatprep.subr.mxu0 0.0
    %1647 = vmatpush2.msra.mxu0 %v474
    %1648 = vmatprep.subr.mxu0 0.0
    %1649 = vmatpush2.msra.mxu0 %v473
    %1650 = vmatprep.subr.mxu0 0.0
    %1651 = vmatpush2.msra.mxu0 %v472
    %1652 = vmatprep.subr.mxu0 0.0
    %1653 = vmatpush2.msra.mxu0 %v471
    %1654 = vmatprep.subr.mxu0 0.0
    %1655 = vmatpush2.msra.mxu0 %v470
    %1656 = vmatprep.subr.mxu0 0.0
    %1657 = vmatpush2.msra.mxu0 %v469
    %1658 = vmatprep.subr.mxu0 0.0
    %1659 = vmatpush2.msra.mxu0 %v468
    %1660 = vmatprep.subr.mxu0 0.0
    %1661 = vmatpush2.msra.mxu0 %v467
    %1662 = vmatprep.subr.mxu0 0.0
    %1663 = vmatpush2.msra.mxu0 %v466
    %1664 = vmatprep.subr.mxu0 0.0
    %1665 = vmatpush2.msra.mxu0 %v465
    %1666 = vmatprep.subr.mxu0 0.0
    %1667 = vmatpush2.msra.mxu0 %v464
    %1668 = vmatprep.subr.mxu0 0.0
    %1669 = vmatpush2.msra.mxu0 %v463
    %1670 = vmatprep.subr.mxu0 0.0
    %1671 = vmatpush2.msra.mxu0 %v462
    %1672 = vmatprep.subr.mxu0 0.0
    %1673 = vmatpush2.msra.mxu0 %v461
    %1674 = vmatprep.subr.mxu0 0.0
    %1675 = vmatpush2.msra.mxu0 %v460
    %1676 = vmatprep.mubr.f32.mxu0 %v41
    %1677 = vmatmul.mubr.f32.gmra.mxu0 %v40
    %v1678 = vpop.f32.mrf.mxu0
    %v1679 = vadd.f32 %v1609, %v1678
    %v1680 = vpop.f32.mrf.mxu0
    %1681 = vdwg.mxu0
    %1682 = vmatprep.subr.mxu0 0.0
    %1683 = vmatpush1.msra.mxu0 %v491
    %1684 = vmatprep.subr.mxu0 0.0
    %1685 = vmatpush1.msra.mxu0 %v490
    %1686 = vmatprep.subr.mxu0 0.0
    %1687 = vmatpush1.msra.mxu0 %v489
    %1688 = vmatprep.subr.mxu0 0.0
    %1689 = vmatpush1.msra.mxu0 %v488
    %1690 = vmatprep.subr.mxu0 0.0
    %1691 = vmatpush1.msra.mxu0 %v487
    %1692 = vmatprep.subr.mxu0 0.0
    %1693 = vmatpush1.msra.mxu0 %v486
    %1694 = vmatprep.subr.mxu0 0.0
    %1695 = vmatpush1.msra.mxu0 %v485
    %1696 = vmatprep.subr.mxu0 0.0
    %1697 = vmatpush1.msra.mxu0 %v484
    %1698 = vmatprep.subr.mxu0 0.0
    %1699 = vmatpush1.msra.mxu0 %v483
    %1700 = vmatprep.subr.mxu0 0.0
    %1701 = vmatpush1.msra.mxu0 %v482
    %1702 = vmatprep.subr.mxu0 0.0
    %1703 = vmatpush1.msra.mxu0 %v481
    %1704 = vmatprep.subr.mxu0 0.0
    %1705 = vmatpush1.msra.mxu0 %v480
    %1706 = vmatprep.subr.mxu0 0.0
    %1707 = vmatpush1.msra.mxu0 %v479
    %1708 = vmatprep.subr.mxu0 0.0
    %1709 = vmatpush1.msra.mxu0 %v478
    %1710 = vmatprep.subr.mxu0 0.0
    %1711 = vmatpush1.msra.mxu0 %v477
    %1712 = vmatprep.subr.mxu0 0.0
    %1713 = vmatpush1.msra.mxu0 %v476
    %1714 = vmatprep.subr.mxu0 0.0
    %1715 = vmatpush2.msra.mxu0 %v507
    %1716 = vmatprep.subr.mxu0 0.0
    %1717 = vmatpush2.msra.mxu0 %v506
    %1718 = vmatprep.subr.mxu0 0.0
    %1719 = vmatpush2.msra.mxu0 %v505
    %1720 = vmatprep.subr.mxu0 0.0
    %1721 = vmatpush2.msra.mxu0 %v504
    %1722 = vmatprep.subr.mxu0 0.0
    %1723 = vmatpush2.msra.mxu0 %v503
    %1724 = vmatprep.subr.mxu0 0.0
    %1725 = vmatpush2.msra.mxu0 %v502
    %1726 = vmatprep.subr.mxu0 0.0
    %1727 = vmatpush2.msra.mxu0 %v501
    %1728 = vmatprep.subr.mxu0 0.0
    %1729 = vmatpush2.msra.mxu0 %v500
    %1730 = vmatprep.subr.mxu0 0.0
    %1731 = vmatpush2.msra.mxu0 %v499
    %1732 = vmatprep.subr.mxu0 0.0
    %1733 = vmatpush2.msra.mxu0 %v498
    %1734 = vmatprep.subr.mxu0 0.0
    %1735 = vmatpush2.msra.mxu0 %v497
    %1736 = vmatprep.subr.mxu0 0.0
    %1737 = vmatpush2.msra.mxu0 %v496
    %1738 = vmatprep.subr.mxu0 0.0
    %1739 = vmatpush2.msra.mxu0 %v495
    %1740 = vmatprep.subr.mxu0 0.0
    %1741 = vmatpush2.msra.mxu0 %v494
    %1742 = vmatprep.subr.mxu0 0.0
    %1743 = vmatpush2.msra.mxu0 %v493
    %1744 = vmatprep.subr.mxu0 0.0
    %1745 = vmatpush2.msra.mxu0 %v492
    %1746 = vmatprep.mubr.f32.mxu0 %v43
    %1747 = vmatmul.mubr.f32.gmra.mxu0 %v42
    %v1748 = vpop.f32.mrf.mxu0
    %v1749 = vadd.f32 %v1679, %v1748
    %v1750 = vpop.f32.mrf.mxu0
    %1751 = vdwg.mxu0
    %1752 = vmatprep.subr.mxu0 0.0
    %1753 = vmatpush1.msra.mxu0 %v523
    %1754 = vmatprep.subr.mxu0 0.0
    %1755 = vmatpush1.msra.mxu0 %v522
    %1756 = vmatprep.subr.mxu0 0.0
    %1757 = vmatpush1.msra.mxu0 %v521
    %1758 = vmatprep.subr.mxu0 0.0
    %1759 = vmatpush1.msra.mxu0 %v520
    %1760 = vmatprep.subr.mxu0 0.0
    %1761 = vmatpush1.msra.mxu0 %v519
    %1762 = vmatprep.subr.mxu0 0.0
    %1763 = vmatpush1.msra.mxu0 %v518
    %1764 = vmatprep.subr.mxu0 0.0
    %1765 = vmatpush1.msra.mxu0 %v517
    %1766 = vmatprep.subr.mxu0 0.0
    %1767 = vmatpush1.msra.mxu0 %v516
    %1768 = vmatprep.subr.mxu0 0.0
    %1769 = vmatpush1.msra.mxu0 %v515
    %1770 = vmatprep.subr.mxu0 0.0
    %1771 = vmatpush1.msra.mxu0 %v514
    %1772 = vmatprep.subr.mxu0 0.0
    %1773 = vmatpush1.msra.mxu0 %v513
    %1774 = vmatprep.subr.mxu0 0.0
    %1775 = vmatpush1.msra.mxu0 %v512
    %1776 = vmatprep.subr.mxu0 0.0
    %1777 = vmatpush1.msra.mxu0 %v511
    %1778 = vmatprep.subr.mxu0 0.0
    %1779 = vmatpush1.msra.mxu0 %v510
    %1780 = vmatprep.subr.mxu0 0.0
    %1781 = vmatpush1.msra.mxu0 %v509
    %1782 = vmatprep.subr.mxu0 0.0
    %1783 = vmatpush1.msra.mxu0 %v508
    %1784 = vmatprep.subr.mxu0 0.0
    %1785 = vmatpush2.msra.mxu0 %v539
    %1786 = vmatprep.subr.mxu0 0.0
    %1787 = vmatpush2.msra.mxu0 %v538
    %1788 = vmatprep.subr.mxu0 0.0
    %1789 = vmatpush2.msra.mxu0 %v537
    %1790 = vmatprep.subr.mxu0 0.0
    %1791 = vmatpush2.msra.mxu0 %v536
    %1792 = vmatprep.subr.mxu0 0.0
    %1793 = vmatpush2.msra.mxu0 %v535
    %1794 = vmatprep.subr.mxu0 0.0
    %1795 = vmatpush2.msra.mxu0 %v534
    %1796 = vmatprep.subr.mxu0 0.0
    %1797 = vmatpush2.msra.mxu0 %v533
    %1798 = vmatprep.subr.mxu0 0.0
    %1799 = vmatpush2.msra.mxu0 %v532
    %1800 = vmatprep.subr.mxu0 0.0
    %1801 = vmatpush2.msra.mxu0 %v531
    %1802 = vmatprep.subr.mxu0 0.0
    %1803 = vmatpush2.msra.mxu0 %v530
    %1804 = vmatprep.subr.mxu0 0.0
    %1805 = vmatpush2.msra.mxu0 %v529
    %1806 = vmatprep.subr.mxu0 0.0
    %1807 = vmatpush2.msra.mxu0 %v528
    %1808 = vmatprep.subr.mxu0 0.0
    %1809 = vmatpush2.msra.mxu0 %v527
    %1810 = vmatprep.subr.mxu0 0.0
    %1811 = vmatpush2.msra.mxu0 %v526
    %1812 = vmatprep.subr.mxu0 0.0
    %1813 = vmatpush2.msra.mxu0 %v525
    %1814 = vmatprep.subr.mxu0 0.0
    %1815 = vmatpush2.msra.mxu0 %v524
    %1816 = vmatprep.mubr.f32.mxu0 %v45
    %1817 = vmatmul.mubr.f32.gmra.mxu0 %v44
    %v1818 = vpop.f32.mrf.mxu0
    %v1819 = vadd.f32 %v1749, %v1818
    %v1820 = vpop.f32.mrf.mxu0
    %1821 = vdwg.mxu0
    %1822 = vmatprep.subr.mxu0 0.0
    %1823 = vmatpush1.msra.mxu0 %v555
    %1824 = vmatprep.subr.mxu0 0.0
    %1825 = vmatpush1.msra.mxu0 %v554
    %1826 = vmatprep.subr.mxu0 0.0
    %1827 = vmatpush1.msra.mxu0 %v553
    %1828 = vmatprep.subr.mxu0 0.0
    %1829 = vmatpush1.msra.mxu0 %v552
    %1830 = vmatprep.subr.mxu0 0.0
    %1831 = vmatpush1.msra.mxu0 %v551
    %1832 = vmatprep.subr.mxu0 0.0
    %1833 = vmatpush1.msra.mxu0 %v550
    %1834 = vmatprep.subr.mxu0 0.0
    %1835 = vmatpush1.msra.mxu0 %v549
    %1836 = vmatprep.subr.mxu0 0.0
    %1837 = vmatpush1.msra.mxu0 %v548
    %1838 = vmatprep.subr.mxu0 0.0
    %1839 = vmatpush1.msra.mxu0 %v547
    %1840 = vmatprep.subr.mxu0 0.0
    %1841 = vmatpush1.msra.mxu0 %v546
    %1842 = vmatprep.subr.mxu0 0.0
    %1843 = vmatpush1.msra.mxu0 %v545
    %1844 = vmatprep.subr.mxu0 0.0
    %1845 = vmatpush1.msra.mxu0 %v544
    %1846 = vmatprep.subr.mxu0 0.0
    %1847 = vmatpush1.msra.mxu0 %v543
    %1848 = vmatprep.subr.mxu0 0.0
    %1849 = vmatpush1.msra.mxu0 %v542
    %1850 = vmatprep.subr.mxu0 0.0
    %1851 = vmatpush1.msra.mxu0 %v541
    %1852 = vmatprep.subr.mxu0 0.0
    %1853 = vmatpush1.msra.mxu0 %v540
    %1854 = vmatprep.subr.mxu0 0.0
    %1855 = vmatpush2.msra.mxu0 %v571
    %1856 = vmatprep.subr.mxu0 0.0
    %1857 = vmatpush2.msra.mxu0 %v570
    %1858 = vmatprep.subr.mxu0 0.0
    %1859 = vmatpush2.msra.mxu0 %v569
    %1860 = vmatprep.subr.mxu0 0.0
    %1861 = vmatpush2.msra.mxu0 %v568
    %1862 = vmatprep.subr.mxu0 0.0
    %1863 = vmatpush2.msra.mxu0 %v567
    %1864 = vmatprep.subr.mxu0 0.0
    %1865 = vmatpush2.msra.mxu0 %v566
    %1866 = vmatprep.subr.mxu0 0.0
    %1867 = vmatpush2.msra.mxu0 %v565
    %1868 = vmatprep.subr.mxu0 0.0
    %1869 = vmatpush2.msra.mxu0 %v564
    %1870 = vmatprep.subr.mxu0 0.0
    %1871 = vmatpush2.msra.mxu0 %v563
    %1872 = vmatprep.subr.mxu0 0.0
    %1873 = vmatpush2.msra.mxu0 %v562
    %1874 = vmatprep.subr.mxu0 0.0
    %1875 = vmatpush2.msra.mxu0 %v561
    %1876 = vmatprep.subr.mxu0 0.0
    %1877 = vmatpush2.msra.mxu0 %v560
    %1878 = vmatprep.subr.mxu0 0.0
    %1879 = vmatpush2.msra.mxu0 %v559
    %1880 = vmatprep.subr.mxu0 0.0
    %1881 = vmatpush2.msra.mxu0 %v558
    %1882 = vmatprep.subr.mxu0 0.0
    %1883 = vmatpush2.msra.mxu0 %v557
    %1884 = vmatprep.subr.mxu0 0.0
    %1885 = vmatpush2.msra.mxu0 %v556
    %1886 = vmatprep.mubr.f32.mxu0 %v47
    %1887 = vmatmul.mubr.f32.gmra.mxu0 %v46
    %v1888 = vpop.f32.mrf.mxu0
    %v1889 = vadd.f32 %v1819, %v1888
    %v1890 = vpop.f32.mrf.mxu0
    %1891 = vdwg.mxu0
    %1892 = vmatprep.subr.mxu0 0.0
    %1893 = vmatpush1.msra.mxu0 %v587
    %1894 = vmatprep.subr.mxu0 0.0
    %1895 = vmatpush1.msra.mxu0 %v586
    %1896 = vmatprep.subr.mxu0 0.0
    %1897 = vmatpush1.msra.mxu0 %v585
    %1898 = vmatprep.subr.mxu0 0.0
    %1899 = vmatpush1.msra.mxu0 %v584
    %1900 = vmatprep.subr.mxu0 0.0
    %1901 = vmatpush1.msra.mxu0 %v583
    %1902 = vmatprep.subr.mxu0 0.0
    %1903 = vmatpush1.msra.mxu0 %v582
    %1904 = vmatprep.subr.mxu0 0.0
    %1905 = vmatpush1.msra.mxu0 %v581
    %1906 = vmatprep.subr.mxu0 0.0
    %1907 = vmatpush1.msra.mxu0 %v580
    %1908 = vmatprep.subr.mxu0 0.0
    %1909 = vmatpush1.msra.mxu0 %v579
    %1910 = vmatprep.subr.mxu0 0.0
    %1911 = vmatpush1.msra.mxu0 %v578
    %1912 = vmatprep.subr.mxu0 0.0
    %1913 = vmatpush1.msra.mxu0 %v577
    %1914 = vmatprep.subr.mxu0 0.0
    %1915 = vmatpush1.msra.mxu0 %v576
    %1916 = vmatprep.subr.mxu0 0.0
    %1917 = vmatpush1.msra.mxu0 %v575
    %1918 = vmatprep.subr.mxu0 0.0
    %1919 = vmatpush1.msra.mxu0 %v574
    %1920 = vmatprep.subr.mxu0 0.0
    %1921 = vmatpush1.msra.mxu0 %v573
    %1922 = vmatprep.subr.mxu0 0.0
    %1923 = vmatpush1.msra.mxu0 %v572
    %1924 = vmatprep.subr.mxu0 0.0
    %1925 = vmatpush2.msra.mxu0 %v603
    %1926 = vmatprep.subr.mxu0 0.0
    %1927 = vmatpush2.msra.mxu0 %v602
    %1928 = vmatprep.subr.mxu0 0.0
    %1929 = vmatpush2.msra.mxu0 %v601
    %1930 = vmatprep.subr.mxu0 0.0
    %1931 = vmatpush2.msra.mxu0 %v600
    %1932 = vmatprep.subr.mxu0 0.0
    %1933 = vmatpush2.msra.mxu0 %v599
    %1934 = vmatprep.subr.mxu0 0.0
    %1935 = vmatpush2.msra.mxu0 %v598
    %1936 = vmatprep.subr.mxu0 0.0
    %1937 = vmatpush2.msra.mxu0 %v597
    %1938 = vmatprep.subr.mxu0 0.0
    %1939 = vmatpush2.msra.mxu0 %v596
    %1940 = vmatprep.subr.mxu0 0.0
    %1941 = vmatpush2.msra.mxu0 %v595
    %1942 = vmatprep.subr.mxu0 0.0
    %1943 = vmatpush2.msra.mxu0 %v594
    %1944 = vmatprep.subr.mxu0 0.0
    %1945 = vmatpush2.msra.mxu0 %v593
    %1946 = vmatprep.subr.mxu0 0.0
    %1947 = vmatpush2.msra.mxu0 %v592
    %1948 = vmatprep.subr.mxu0 0.0
    %1949 = vmatpush2.msra.mxu0 %v591
    %1950 = vmatprep.subr.mxu0 0.0
    %1951 = vmatpush2.msra.mxu0 %v590
    %1952 = vmatprep.subr.mxu0 0.0
    %1953 = vmatpush2.msra.mxu0 %v589
    %1954 = vmatprep.subr.mxu0 0.0
    %1955 = vmatpush2.msra.mxu0 %v588
    %1956 = vmatprep.mubr.f32.mxu0 %v49
    %1957 = vmatmul.mubr.f32.gmra.mxu0 %v48
    %v1958 = vpop.f32.mrf.mxu0
    %v1959 = vadd.f32 %v1889, %v1958
    %v1960 = vpop.f32.mrf.mxu0
    %1961 = vdwg.mxu0
    %1962 = vmatprep.subr.mxu0 0.0
    %1963 = vmatpush1.msra.mxu0 %v619
    %1964 = vmatprep.subr.mxu0 0.0
    %1965 = vmatpush1.msra.mxu0 %v618
    %1966 = vmatprep.subr.mxu0 0.0
    %1967 = vmatpush1.msra.mxu0 %v617
    %1968 = vmatprep.subr.mxu0 0.0
    %1969 = vmatpush1.msra.mxu0 %v616
    %1970 = vmatprep.subr.mxu0 0.0
    %1971 = vmatpush1.msra.mxu0 %v615
    %1972 = vmatprep.subr.mxu0 0.0
    %1973 = vmatpush1.msra.mxu0 %v614
    %1974 = vmatprep.subr.mxu0 0.0
    %1975 = vmatpush1.msra.mxu0 %v613
    %1976 = vmatprep.subr.mxu0 0.0
    %1977 = vmatpush1.msra.mxu0 %v612
    %1978 = vmatprep.subr.mxu0 0.0
    %1979 = vmatpush1.msra.mxu0 %v611
    %1980 = vmatprep.subr.mxu0 0.0
    %1981 = vmatpush1.msra.mxu0 %v610
    %1982 = vmatprep.subr.mxu0 0.0
    %1983 = vmatpush1.msra.mxu0 %v609
    %1984 = vmatprep.subr.mxu0 0.0
    %1985 = vmatpush1.msra.mxu0 %v608
    %1986 = vmatprep.subr.mxu0 0.0
    %1987 = vmatpush1.msra.mxu0 %v607
    %1988 = vmatprep.subr.mxu0 0.0
    %1989 = vmatpush1.msra.mxu0 %v606
    %1990 = vmatprep.subr.mxu0 0.0
    %1991 = vmatpush1.msra.mxu0 %v605
    %1992 = vmatprep.subr.mxu0 0.0
    %1993 = vmatpush1.msra.mxu0 %v604
    %1994 = vmatprep.subr.mxu0 0.0
    %1995 = vmatpush2.msra.mxu0 %v635
    %1996 = vmatprep.subr.mxu0 0.0
    %1997 = vmatpush2.msra.mxu0 %v634
    %1998 = vmatprep.subr.mxu0 0.0
    %1999 = vmatpush2.msra.mxu0 %v633
    %2000 = vmatprep.subr.mxu0 0.0
    %2001 = vmatpush2.msra.mxu0 %v632
    %2002 = vmatprep.subr.mxu0 0.0
    %2003 = vmatpush2.msra.mxu0 %v631
    %2004 = vmatprep.subr.mxu0 0.0
    %2005 = vmatpush2.msra.mxu0 %v630
    %2006 = vmatprep.subr.mxu0 0.0
    %2007 = vmatpush2.msra.mxu0 %v629
    %2008 = vmatprep.subr.mxu0 0.0
    %2009 = vmatpush2.msra.mxu0 %v628
    %2010 = vmatprep.subr.mxu0 0.0
    %2011 = vmatpush2.msra.mxu0 %v627
    %2012 = vmatprep.subr.mxu0 0.0
    %2013 = vmatpush2.msra.mxu0 %v626
    %2014 = vmatprep.subr.mxu0 0.0
    %2015 = vmatpush2.msra.mxu0 %v625
    %2016 = vmatprep.subr.mxu0 0.0
    %2017 = vmatpush2.msra.mxu0 %v624
    %2018 = vmatprep.subr.mxu0 0.0
    %2019 = vmatpush2.msra.mxu0 %v623
    %2020 = vmatprep.subr.mxu0 0.0
    %2021 = vmatpush2.msra.mxu0 %v622
    %2022 = vmatprep.subr.mxu0 0.0
    %2023 = vmatpush2.msra.mxu0 %v621
    %2024 = vmatprep.subr.mxu0 0.0
    %2025 = vmatpush2.msra.mxu0 %v620
    %2026 = vmatprep.mubr.f32.mxu0 %v51
    %2027 = vmatmul.mubr.f32.gmra.mxu0 %v50
    %v2028 = vpop.f32.mrf.mxu0
    %v2029 = vadd.f32 %v1959, %v2028
    %v2030 = vpop.f32.mrf.mxu0
    %2031 = vdwg.mxu0
    %2032 = vmatprep.subr.mxu0 0.0
    %2033 = vmatpush1.msra.mxu0 %v651
    %2034 = vmatprep.subr.mxu0 0.0
    %2035 = vmatpush1.msra.mxu0 %v650
    %2036 = vmatprep.subr.mxu0 0.0
    %2037 = vmatpush1.msra.mxu0 %v649
    %2038 = vmatprep.subr.mxu0 0.0
    %2039 = vmatpush1.msra.mxu0 %v648
    %2040 = vmatprep.subr.mxu0 0.0
    %2041 = vmatpush1.msra.mxu0 %v647
    %2042 = vmatprep.subr.mxu0 0.0
    %2043 = vmatpush1.msra.mxu0 %v646
    %2044 = vmatprep.subr.mxu0 0.0
    %2045 = vmatpush1.msra.mxu0 %v645
    %2046 = vmatprep.subr.mxu0 0.0
    %2047 = vmatpush1.msra.mxu0 %v644
    %2048 = vmatprep.subr.mxu0 0.0
    %2049 = vmatpush1.msra.mxu0 %v643
    %2050 = vmatprep.subr.mxu0 0.0
    %2051 = vmatpush1.msra.mxu0 %v642
    %2052 = vmatprep.subr.mxu0 0.0
    %2053 = vmatpush1.msra.mxu0 %v641
    %2054 = vmatprep.subr.mxu0 0.0
    %2055 = vmatpush1.msra.mxu0 %v640
    %2056 = vmatprep.subr.mxu0 0.0
    %2057 = vmatpush1.msra.mxu0 %v639
    %2058 = vmatprep.subr.mxu0 0.0
    %2059 = vmatpush1.msra.mxu0 %v638
    %2060 = vmatprep.subr.mxu0 0.0
    %2061 = vmatpush1.msra.mxu0 %v637
    %2062 = vmatprep.subr.mxu0 0.0
    %2063 = vmatpush1.msra.mxu0 %v636
    %2064 = vmatprep.subr.mxu0 0.0
    %2065 = vmatpush2.msra.mxu0 %v667
    %2066 = vmatprep.subr.mxu0 0.0
    %2067 = vmatpush2.msra.mxu0 %v666
    %2068 = vmatprep.subr.mxu0 0.0
    %2069 = vmatpush2.msra.mxu0 %v665
    %2070 = vmatprep.subr.mxu0 0.0
    %2071 = vmatpush2.msra.mxu0 %v664
    %2072 = vmatprep.subr.mxu0 0.0
    %2073 = vmatpush2.msra.mxu0 %v663
    %2074 = vmatprep.subr.mxu0 0.0
    %2075 = vmatpush2.msra.mxu0 %v662
    %2076 = vmatprep.subr.mxu0 0.0
    %2077 = vmatpush2.msra.mxu0 %v661
    %2078 = vmatprep.subr.mxu0 0.0
    %2079 = vmatpush2.msra.mxu0 %v660
    %2080 = vmatprep.subr.mxu0 0.0
    %2081 = vmatpush2.msra.mxu0 %v659
    %2082 = vmatprep.subr.mxu0 0.0
    %2083 = vmatpush2.msra.mxu0 %v658
    %2084 = vmatprep.subr.mxu0 0.0
    %2085 = vmatpush2.msra.mxu0 %v657
    %2086 = vmatprep.subr.mxu0 0.0
    %2087 = vmatpush2.msra.mxu0 %v656
    %2088 = vmatprep.subr.mxu0 0.0
    %2089 = vmatpush2.msra.mxu0 %v655
    %2090 = vmatprep.subr.mxu0 0.0
    %2091 = vmatpush2.msra.mxu0 %v654
    %2092 = vmatprep.subr.mxu0 0.0
    %2093 = vmatpush2.msra.mxu0 %v653
    %2094 = vmatprep.subr.mxu0 0.0
    %2095 = vmatpush2.msra.mxu0 %v652
    %2096 = vmatprep.mubr.f32.mxu0 %v53
    %2097 = vmatmul.mubr.f32.gmra.mxu0 %v52
    %v2098 = vpop.f32.mrf.mxu0
    %v2099 = vadd.f32 %v2029, %v2098
    %v2100 = vpop.f32.mrf.mxu0
    %2101 = vdwg.mxu0
    %2102 = vmatprep.subr.mxu0 0.0
    %2103 = vmatpush1.msra.mxu0 %v683
    %2104 = vmatprep.subr.mxu0 0.0
    %2105 = vmatpush1.msra.mxu0 %v682
    %2106 = vmatprep.subr.mxu0 0.0
    %2107 = vmatpush1.msra.mxu0 %v681
    %2108 = vmatprep.subr.mxu0 0.0
    %2109 = vmatpush1.msra.mxu0 %v680
    %2110 = vmatprep.subr.mxu0 0.0
    %2111 = vmatpush1.msra.mxu0 %v679
    %2112 = vmatprep.subr.mxu0 0.0
    %2113 = vmatpush1.msra.mxu0 %v678
    %2114 = vmatprep.subr.mxu0 0.0
    %2115 = vmatpush1.msra.mxu0 %v677
    %2116 = vmatprep.subr.mxu0 0.0
    %2117 = vmatpush1.msra.mxu0 %v676
    %2118 = vmatprep.subr.mxu0 0.0
    %2119 = vmatpush1.msra.mxu0 %v675
    %2120 = vmatprep.subr.mxu0 0.0
    %2121 = vmatpush1.msra.mxu0 %v674
    %2122 = vmatprep.subr.mxu0 0.0
    %2123 = vmatpush1.msra.mxu0 %v673
    %2124 = vmatprep.subr.mxu0 0.0
    %2125 = vmatpush1.msra.mxu0 %v672
    %2126 = vmatprep.subr.mxu0 0.0
    %2127 = vmatpush1.msra.mxu0 %v671
    %2128 = vmatprep.subr.mxu0 0.0
    %2129 = vmatpush1.msra.mxu0 %v670
    %2130 = vmatprep.subr.mxu0 0.0
    %2131 = vmatpush1.msra.mxu0 %v669
    %2132 = vmatprep.subr.mxu0 0.0
    %2133 = vmatpush1.msra.mxu0 %v668
    %2134 = vmatprep.subr.mxu0 0.0
    %2135 = vmatpush2.msra.mxu0 %v699
    %2136 = vmatprep.subr.mxu0 0.0
    %2137 = vmatpush2.msra.mxu0 %v698
    %2138 = vmatprep.subr.mxu0 0.0
    %2139 = vmatpush2.msra.mxu0 %v697
    %2140 = vmatprep.subr.mxu0 0.0
    %2141 = vmatpush2.msra.mxu0 %v696
    %2142 = vmatprep.subr.mxu0 0.0
    %2143 = vmatpush2.msra.mxu0 %v695
    %2144 = vmatprep.subr.mxu0 0.0
    %2145 = vmatpush2.msra.mxu0 %v694
    %2146 = vmatprep.subr.mxu0 0.0
    %2147 = vmatpush2.msra.mxu0 %v693
    %2148 = vmatprep.subr.mxu0 0.0
    %2149 = vmatpush2.msra.mxu0 %v692
    %2150 = vmatprep.subr.mxu0 0.0
    %2151 = vmatpush2.msra.mxu0 %v691
    %2152 = vmatprep.subr.mxu0 0.0
    %2153 = vmatpush2.msra.mxu0 %v690
    %2154 = vmatprep.subr.mxu0 0.0
    %2155 = vmatpush2.msra.mxu0 %v689
    %2156 = vmatprep.subr.mxu0 0.0
    %2157 = vmatpush2.msra.mxu0 %v688
    %2158 = vmatprep.subr.mxu0 0.0
    %2159 = vmatpush2.msra.mxu0 %v687
    %2160 = vmatprep.subr.mxu0 0.0
    %2161 = vmatpush2.msra.mxu0 %v686
    %2162 = vmatprep.subr.mxu0 0.0
    %2163 = vmatpush2.msra.mxu0 %v685
    %2164 = vmatprep.subr.mxu0 0.0
    %2165 = vmatpush2.msra.mxu0 %v684
    %2166 = vmatprep.mubr.f32.mxu0 %v55
    %2167 = vmatmul.mubr.f32.gmra.mxu0 %v54
    %v2168 = vpop.f32.mrf.mxu0
    %v2169 = vadd.f32 %v2099, %v2168
    %v2170 = vpop.f32.mrf.mxu0
    %2171 = vdwg.mxu0
    %2172 = vmatprep.subr.mxu0 0.0
    %2173 = vmatpush1.msra.mxu0 %v715
    %2174 = vmatprep.subr.mxu0 0.0
    %2175 = vmatpush1.msra.mxu0 %v714
    %2176 = vmatprep.subr.mxu0 0.0
    %2177 = vmatpush1.msra.mxu0 %v713
    %2178 = vmatprep.subr.mxu0 0.0
    %2179 = vmatpush1.msra.mxu0 %v712
    %2180 = vmatprep.subr.mxu0 0.0
    %2181 = vmatpush1.msra.mxu0 %v711
    %2182 = vmatprep.subr.mxu0 0.0
    %2183 = vmatpush1.msra.mxu0 %v710
    %2184 = vmatprep.subr.mxu0 0.0
    %2185 = vmatpush1.msra.mxu0 %v709
    %2186 = vmatprep.subr.mxu0 0.0
    %2187 = vmatpush1.msra.mxu0 %v708
    %2188 = vmatprep.subr.mxu0 0.0
    %2189 = vmatpush1.msra.mxu0 %v707
    %2190 = vmatprep.subr.mxu0 0.0
    %2191 = vmatpush1.msra.mxu0 %v706
    %2192 = vmatprep.subr.mxu0 0.0
    %2193 = vmatpush1.msra.mxu0 %v705
    %2194 = vmatprep.subr.mxu0 0.0
    %2195 = vmatpush1.msra.mxu0 %v704
    %2196 = vmatprep.subr.mxu0 0.0
    %2197 = vmatpush1.msra.mxu0 %v703
    %2198 = vmatprep.subr.mxu0 0.0
    %2199 = vmatpush1.msra.mxu0 %v702
    %2200 = vmatprep.subr.mxu0 0.0
    %2201 = vmatpush1.msra.mxu0 %v701
    %2202 = vmatprep.subr.mxu0 0.0
    %2203 = vmatpush1.msra.mxu0 %v700
    %2204 = vmatprep.subr.mxu0 0.0
    %2205 = vmatpush2.msra.mxu0 %v731
    %2206 = vmatprep.subr.mxu0 0.0
    %2207 = vmatpush2.msra.mxu0 %v730
    %2208 = vmatprep.subr.mxu0 0.0
    %2209 = vmatpush2.msra.mxu0 %v729
    %2210 = vmatprep.subr.mxu0 0.0
    %2211 = vmatpush2.msra.mxu0 %v728
    %2212 = vmatprep.subr.mxu0 0.0
    %2213 = vmatpush2.msra.mxu0 %v727
    %2214 = vmatprep.subr.mxu0 0.0
    %2215 = vmatpush2.msra.mxu0 %v726
    %2216 = vmatprep.subr.mxu0 0.0
    %2217 = vmatpush2.msra.mxu0 %v725
    %2218 = vmatprep.subr.mxu0 0.0
    %2219 = vmatpush2.msra.mxu0 %v724
    %2220 = vmatprep.subr.mxu0 0.0
    %2221 = vmatpush2.msra.mxu0 %v723
    %2222 = vmatprep.subr.mxu0 0.0
    %2223 = vmatpush2.msra.mxu0 %v722
    %2224 = vmatprep.subr.mxu0 0.0
    %2225 = vmatpush2.msra.mxu0 %v721
    %2226 = vmatprep.subr.mxu0 0.0
    %2227 = vmatpush2.msra.mxu0 %v720
    %2228 = vmatprep.subr.mxu0 0.0
    %2229 = vmatpush2.msra.mxu0 %v719
    %2230 = vmatprep.subr.mxu0 0.0
    %2231 = vmatpush2.msra.mxu0 %v718
    %2232 = vmatprep.subr.mxu0 0.0
    %2233 = vmatpush2.msra.mxu0 %v717
    %2234 = vmatprep.subr.mxu0 0.0
    %2235 = vmatpush2.msra.mxu0 %v716
    %2236 = vmatprep.mubr.f32.mxu0 %v57
    %2237 = vmatmul.mubr.f32.gmra.mxu0 %v56
    %v2238 = vpop.f32.mrf.mxu0
    %v2239 = vadd.f32 %v2169, %v2238
    %v2240 = vpop.f32.mrf.mxu0
    %2241 = vdwg.mxu0
    %2242 = vmatprep.subr.mxu0 0.0
    %2243 = vmatpush1.msra.mxu0 %v747
    %2244 = vmatprep.subr.mxu0 0.0
    %2245 = vmatpush1.msra.mxu0 %v746
    %2246 = vmatprep.subr.mxu0 0.0
    %2247 = vmatpush1.msra.mxu0 %v745
    %2248 = vmatprep.subr.mxu0 0.0
    %2249 = vmatpush1.msra.mxu0 %v744
    %2250 = vmatprep.subr.mxu0 0.0
    %2251 = vmatpush1.msra.mxu0 %v743
    %2252 = vmatprep.subr.mxu0 0.0
    %2253 = vmatpush1.msra.mxu0 %v742
    %2254 = vmatprep.subr.mxu0 0.0
    %2255 = vmatpush1.msra.mxu0 %v741
    %2256 = vmatprep.subr.mxu0 0.0
    %2257 = vmatpush1.msra.mxu0 %v740
    %2258 = vmatprep.subr.mxu0 0.0
    %2259 = vmatpush1.msra.mxu0 %v739
    %2260 = vmatprep.subr.mxu0 0.0
    %2261 = vmatpush1.msra.mxu0 %v738
    %2262 = vmatprep.subr.mxu0 0.0
    %2263 = vmatpush1.msra.mxu0 %v737
    %2264 = vmatprep.subr.mxu0 0.0
    %2265 = vmatpush1.msra.mxu0 %v736
    %2266 = vmatprep.subr.mxu0 0.0
    %2267 = vmatpush1.msra.mxu0 %v735
    %2268 = vmatprep.subr.mxu0 0.0
    %2269 = vmatpush1.msra.mxu0 %v734
    %2270 = vmatprep.subr.mxu0 0.0
    %2271 = vmatpush1.msra.mxu0 %v733
    %2272 = vmatprep.subr.mxu0 0.0
    %2273 = vmatpush1.msra.mxu0 %v732
    %2274 = vmatprep.subr.mxu0 0.0
    %2275 = vmatpush2.msra.mxu0 %v770
    %2276 = vmatprep.subr.mxu0 0.0
    %2277 = vmatpush2.msra.mxu0 %v762
    %2278 = vmatprep.subr.mxu0 0.0
    %2279 = vmatpush2.msra.mxu0 %v761
    %2280 = vmatprep.subr.mxu0 0.0
    %2281 = vmatpush2.msra.mxu0 %v760
    %2282 = vmatprep.subr.mxu0 0.0
    %2283 = vmatpush2.msra.mxu0 %v759
    %2284 = vmatprep.subr.mxu0 0.0
    %2285 = vmatpush2.msra.mxu0 %v758
    %2286 = vmatprep.subr.mxu0 0.0
    %2287 = vmatpush2.msra.mxu0 %v757
    %2288 = vmatprep.subr.mxu0 0.0
    %2289 = vmatpush2.msra.mxu0 %v756
    %2290 = vmatprep.subr.mxu0 0.0
    %2291 = vmatpush2.msra.mxu0 %v755
    %2292 = vmatprep.subr.mxu0 0.0
    %2293 = vmatpush2.msra.mxu0 %v754
    %2294 = vmatprep.subr.mxu0 0.0
    %2295 = vmatpush2.msra.mxu0 %v753
    %2296 = vmatprep.subr.mxu0 0.0
    %2297 = vmatpush2.msra.mxu0 %v752
    %2298 = vmatprep.subr.mxu0 0.0
    %2299 = vmatpush2.msra.mxu0 %v751
    %2300 = vmatprep.subr.mxu0 0.0
    %2301 = vmatpush2.msra.mxu0 %v750
    %2302 = vmatprep.subr.mxu0 0.0
    %2303 = vmatpush2.msra.mxu0 %v749
    %2304 = vmatprep.subr.mxu0 0.0
    %2305 = vmatpush2.msra.mxu0 %v748
    %2306 = vmatprep.mubr.f32.mxu0 %v766
    %2307 = vmatmul.mubr.f32.gmra.mxu0 %v58
    %v2308 = vpop.f32.mrf.mxu0
    %v2309 = vadd.f32 %v2239, %v2308
    %v2310 = vpop.f32.mrf.mxu0
    %2311 = vdwg.mxu0
    %v2313 = vlaneseq
    %v2314 = vshrl.u32 %v2313, 7
    %v2315 = vsub.s32 0, %v2314
    %v2316 = vrot.slane %v15, %v2315
    %v2318 = vadd.f32 %v2316, %v2309
    %vm2319 = vcmask 80896
    %2320 = vst.msk [vmem:[#allocation2] sm:$0xff] %vm2319, %v2318
    // Predicated region
    $region14: #{tpu_custom_call.1} parent=1 // pred_check
      _
    $region15: #{tpu_custom_call.1} parent=1 // pred_check_branch
      %2322 = sbr.rel (0) target = $region17
    $region16: #{tpu_custom_call.1} parent=1 // pred_region
      %s2324 = ssub.s32 128, 128
      %2325 = vsyncadd [#allocation3], %s2324
      %s2327 = sshll.u32 [#allocation2], 4
      %s2328 = int_to_ptr.vmem [resolvable:$true] %s2327
      %2330 = dma.vmem_to_hbm [thread:$0]  %s2328, 128, %s3, [#allocation3]
    $region17: #{tpu_custom_call.1} parent=1 // pred_fallthru
      _
    // Predicated region
    $region18: #{tpu_custom_call.1} parent=1 // pred_check
      _
    $region19: #{tpu_custom_call.1} parent=1 // pred_check_branch
      %2332 = sbr.rel (0) target = $region21
    $region20: #{tpu_custom_call.1} parent=1 // pred_region
      %2333 = dma.done [#allocation3], 128
    $region21: #{tpu_custom_call.1} parent=1 // pred_fallthru
      _
    %2334 = vsyncpa [#allocation3], 1

</llo_original>
